<compile_context>
chip_gen: v6e
topology: v6e:2x2x1
jax: 0.10.0
libtpu: 0.0.40
codegen_flags: <defaults>
</compile_context>

<pallas_src>
import functools

import jax
import jax.numpy as jnp
from jax.experimental import pallas as pl
from jax.experimental.pallas import tpu as pltpu

LANE = 128          # TPU lane width; all feature dims zero-padded to this
HALF = LANE // 2    # agg packed into lanes [0, HALF), h into lanes [HALF, LANE)

# Set to jnp.bfloat16 on v6e/v7x for higher MXU throughput (loosens the 1e-4
# reference check to ~1e-2); kept f32 so the tight correctness check holds.
MXU_DTYPE = jnp.float32


def _mxu(a, b):
    """MXU matmul with f32 accumulation (optionally bf16 inputs)."""
    return jnp.dot(a.astype(MXU_DTYPE), b.astype(MXU_DTYPE),
                   preferred_element_type=jnp.float32)


# ----------------------------------------------------------------------------
# Fused Pallas kernel: GNN layers -> one-hot edge gather -> predictor MLP
# ----------------------------------------------------------------------------
def fused_sage_kernel(x_ref,      # VMEM (N, LANE)        padded node features
                      adj_ref,    # VMEM (L, N, N)         row-normalized adjacency
                      wcat_ref,   # VMEM (L, LANE, LANE)   roll-packed [W_neigh ; W_self]
                      wpred_ref,  # VMEM (3, LANE, LANE)   predictor weights (padded)
                      bias_ref,   # VMEM (L+3, 1, LANE)    layer biases then predictor biases
                      sel_ref,    # VMEM (2, E_pad, N)     one-hot src / dst selectors
                      o_ref,      # VMEM (E_pad, LANE)     lane-dense output slab
                      *, num_layers):
    # ---- GNN layers: h lives entirely in vregs -------------------------------
    h = x_ref[...]
    for l in range(num_layers):                       # static unroll (L = 3)
        agg = _mxu(adj_ref[l], h)                     # mean aggregation on MXU
        # pack [agg | h] into ONE 128-lane operand (exact: both are zero past
        # lane HALF), so the fused neighbor+self projection has K=128 not 256.
        m = agg + pltpu.roll(h, HALF, axis=1)         # XLU lane rotate (free slot)
        h = _mxu(m, wcat_ref[l]) + bias_ref[l]
        if l != num_layers - 1:
            h = jnp.maximum(h, 0.0)

    # ---- edge gather as one-hot matmuls (no scalar loop, no VMEM round trip) -
    g_src = _mxu(sel_ref[0], h)                       # (E_pad, LANE) = h[src]
    g_dst = _mxu(sel_ref[1], h)                       # (E_pad, LANE) = h[dst]
    z = g_src * g_dst

    # ---- predictor MLP on all (pos + neg) edges at once ----------------------
    z = jnp.maximum(_mxu(z, wpred_ref[0]) + bias_ref[num_layers], 0.0)
    z = jnp.maximum(_mxu(z, wpred_ref[1]) + bias_ref[num_layers + 1], 0.0)
    o_ref[...] = (_mxu(z, wpred_ref[2]) + bias_ref[num_layers + 2]
                  ).astype(o_ref.dtype)


# ----------------------------------------------------------------------------
# Host-side wrapper (pads to lane width, packs operands, launches one kernel)
# ----------------------------------------------------------------------------
def _pad2d(a, rows, cols):
    a = jnp.asarray(a, jnp.float32)
    if a.ndim == 1:
        a = a.reshape(1, -1)
    out = jnp.zeros((rows, cols), jnp.float32)
    return out.at[:a.shape[0], :a.shape[1]].set(a)


def sage_forward(adjs, x, layer_params, pred_params, pos_edges, neg_edges):
    """Full SAGE.forward (GNN layers -> edge gather -> MLP) in ONE pallas_call."""
    n = x.shape[0]
    num_layers = len(layer_params)

    # roll-packing requires every real feature dim to fit in half a vreg lane row
    for w_n, w_s, _ in layer_params:
        assert w_n.shape[0] <= HALF and w_s.shape[0] <= HALF and w_n.shape[1] <= HALF

    # node features padded to the 128-lane width (zero pad is inert)
    x_pad = _pad2d(x, n, LANE)
    adj_stack = jnp.stack([jnp.asarray(a, jnp.float32) for a in adjs])          # (L, N, N)

    # per-layer packed weight: rows [0, in) = W_neigh, rows [HALF, HALF+in) = W_self
    wcat, biases = [], []
    for w_n, w_s, b in layer_params:
        w = jnp.zeros((LANE, LANE), jnp.float32)
        w = w.at[:w_n.shape[0], :w_n.shape[1]].set(jnp.asarray(w_n, jnp.float32))
        w = w.at[HALF:HALF + w_s.shape[0], :w_s.shape[1]].set(jnp.asarray(w_s, jnp.float32))
        wcat.append(w)
        biases.append(_pad2d(b, 1, LANE))
    wcat_stack = jnp.stack(wcat)                                                # (L, LANE, LANE)

    # predictor weights stacked into one array; biases appended to the bias stack
    wpred = []
    for w, b in pred_params:
        wpred.append(_pad2d(w, LANE, LANE))
        biases.append(_pad2d(b, 1, LANE))
    wpred_stack = jnp.stack(wpred)                                              # (3, LANE, LANE)
    bias_stack = jnp.stack(biases)                                              # (L+3, 1, LANE)

    # concatenate pos + neg edges, pad to a sublane multiple, build one-hot selectors
    pos_src, pos_dst = pos_edges
    neg_src, neg_dst = neg_edges
    n_pos, n_neg = int(pos_src.shape[0]), int(neg_src.shape[0])
    e_total = n_pos + n_neg
    e_pad = max(8, ((e_total + 7) // 8) * 8)
    src = jnp.concatenate([pos_src, neg_src]).astype(jnp.int32)
    dst = jnp.concatenate([pos_dst, neg_dst]).astype(jnp.int32)
    # pad entries index out-of-range -> all-zero one-hot rows (sliced off anyway)
    src_p = jnp.full((e_pad,), n, jnp.int32).at[:e_total].set(src)
    dst_p = jnp.full((e_pad,), n, jnp.int32).at[:e_total].set(dst)
    sel_stack = jnp.stack([jax.nn.one_hot(src_p, n, dtype=jnp.float32),
                           jax.nn.one_hot(dst_p, n, dtype=jnp.float32)])        # (2, E_pad, N)

    vmem = pl.BlockSpec(memory_space=pltpu.MemorySpace.VMEM)
    kernel = functools.partial(fused_sage_kernel, num_layers=num_layers)
    out_slab = pl.pallas_call(
        kernel,
        out_shape=jax.ShapeDtypeStruct((e_pad, LANE), jnp.float32),
        in_specs=[vmem] * 6,
        out_specs=vmem,
    )(x_pad, adj_stack, wcat_stack, wpred_stack, bias_stack, sel_stack)

    scores = out_slab[:e_total, :1]                  # real score is column 0
    return scores[:n_pos], scores[n_pos:]


# ----------------------------------------------------------------------------
# Pure-JAX reference (for correctness check; full-f32 precision matmuls)
# ----------------------------------------------------------------------------
def sage_forward_ref(adjs, x, layer_params, pred_params, pos_edges, neg_edges):
    hp = jax.lax.Precision.HIGHEST

    def mm(a, b):
        return jnp.dot(a, b, precision=hp)

    h = x
    num_layers = len(layer_params)
    for l, (a_norm, (w_n, w_s, b)) in enumerate(zip(adjs, layer_params)):
        h = mm(mm(a_norm, h), w_n) + mm(h, w_s) + b
        if l != num_layers - 1:
            h = jnp.maximum(h, 0.0)

    def mlp(z):
        (w1, b1), (w2, b2), (w3, b3) = pred_params
        z = jnp.maximum(mm(z, w1) + b1, 0.0)
        z = jnp.maximum(mm(z, w2) + b2, 0.0)
        return mm(z, w3) + b3

    ps, pd = pos_edges
    ns, nd = neg_edges
    return mlp(h[ps] * h[pd]), mlp(h[ns] * h[nd])


# ----------------------------------------------------------------------------
# Main
# ----------------------------------------------------------------------------
if __name__ == "__main__":
    key = jax.random.PRNGKey(0)

    N = 64          # nodes per "block"
    IN_SIZE = 16    # input feature size
    HID = 32        # hidden size
    NUM_LAYERS = 3
    E_POS = 16      # positive edges
    E_NEG = 16      # negative edges

    keys = jax.random.split(key, 32)
    ki = iter(keys)

    # node features
    x = jax.random.normal(next(ki), (N, IN_SIZE), dtype=jnp.float32)

    # dense adjacency per layer ("blocks"), row-normalized for 'mean' aggregation
    adjs = []
    for _ in range(NUM_LAYERS):
        a = (jax.random.uniform(next(ki), (N, N)) < 0.2).astype(jnp.float32)
        a = a + jnp.eye(N, dtype=jnp.float32)          # ensure nonzero degree
        deg = jnp.sum(a, axis=1, keepdims=True)
        adjs.append(a / deg)

    # SAGEConv parameters: fc_neigh (no bias), fc_self (no bias), shared bias
    def lin_init(k, fan_in, fan_out):
        bound = 1.0 / jnp.sqrt(fan_in)
        return jax.random.uniform(k, (fan_in, fan_out), minval=-bound, maxval=bound,
                                  dtype=jnp.float32)

    layer_params = []
    dims = [IN_SIZE] + [HID] * NUM_LAYERS
    for l in range(NUM_LAYERS):
        w_n = lin_init(next(ki), dims[l], dims[l + 1])
        w_s = lin_init(next(ki), dims[l], dims[l + 1])
        b = jax.random.uniform(next(ki), (dims[l + 1],), minval=-0.1, maxval=0.1,
                               dtype=jnp.float32)
        layer_params.append((w_n, w_s, b))

    # predictor MLP: Linear(HID,HID) -> ReLU -> Linear(HID,HID) -> ReLU -> Linear(HID,1)
    pred_params = []
    for fan_in, fan_out in [(HID, HID), (HID, HID), (HID, 1)]:
        w = lin_init(next(ki), fan_in, fan_out)
        b = jax.random.uniform(next(ki), (fan_out,), minval=-0.1, maxval=0.1,
                               dtype=jnp.float32)
        pred_params.append((w, b))

    # pos / neg edge lists (src, dst node indices)
    pos_src = jax.random.randint(next(ki), (E_POS,), 0, N)
    pos_dst = jax.random.randint(next(ki), (E_POS,), 0, N)
    neg_src = jax.random.randint(next(ki), (E_NEG,), 0, N)
    neg_dst = jax.random.randint(next(ki), (E_NEG,), 0, N)

    h_pos, h_neg = sage_forward(adjs, x, layer_params, pred_params,
                                (pos_src, pos_dst), (neg_src, neg_dst))
    jax.block_until_ready((h_pos, h_neg))

    # correctness check against pure-JAX reference
    r_pos, r_neg = sage_forward_ref(adjs, x, layer_params, pred_params,
                                    (pos_src, pos_dst), (neg_src, neg_dst))
    assert h_pos.shape == (E_POS, 1) and h_neg.shape == (E_NEG, 1)
    assert jnp.allclose(h_pos, r_pos, atol=1e-4, rtol=1e-4)
    assert jnp.allclose(h_neg, r_neg, atol=1e-4, rtol=1e-4)

    print("KERNEL_OK")
</pallas_src>

<mosaic_0001>
module attributes {stable_mosaic.version = 11 : i64} {
  func.func @fused_sage_kernel(%arg0: memref<64x128xf32, #tpu.memory_space<vmem>>, %arg1: memref<3x64x64xf32, #tpu.memory_space<vmem>>, %arg2: memref<3x128x128xf32, #tpu.memory_space<vmem>>, %arg3: memref<3x128x128xf32, #tpu.memory_space<vmem>>, %arg4: memref<6x1x128xf32, #tpu.memory_space<vmem>>, %arg5: memref<2x32x64xf32, #tpu.memory_space<vmem>>, %arg6: memref<32x128xf32, #tpu.memory_space<vmem>>) attributes {dimension_semantics = [], scalar_prefetch = 0 : i64, scratch_operands = 0 : i64, tpu.core_type = #tpu.core_type<tc>} {
    %c0 = arith.constant 0 : index
    %c0_0 = arith.constant 0 : index
    %0 = vector.load %arg0[%c0, %c0_0] : memref<64x128xf32, #tpu.memory_space<vmem>>, vector<64x128xf32>
    %c0_1 = arith.constant 0 : index
    %c0_2 = arith.constant 0 : index
    %c0_3 = arith.constant 0 : index
    %1 = vector.load %arg1[%c0_1, %c0_2, %c0_3] : memref<3x64x64xf32, #tpu.memory_space<vmem>>, vector<1x64x64xf32>
    %2 = vector.shape_cast %1 : vector<1x64x64xf32> to vector<64x64xf32>
    %cst = arith.constant dense<0.000000e+00> : vector<64x128xf32>
    %3 = tpu.matmul %2, %0, %cst {dimension_numbers = #tpu.dot_dimension_numbers<[1], [0], [0], [1], [0, 0, 1, 1], [], []>} : vector<64x64xf32>, vector<64x128xf32>, vector<64x128xf32> -> vector<64x128xf32>
    %c64_i32 = arith.constant 64 : i32
    %4 = tpu.dynamic_rotate %0 by %c64_i32 dim 1 : vector<64x128xf32>, i32 -> vector<64x128xf32>
    %5 = arith.addf %3, %4 : vector<64x128xf32>
    %c0_4 = arith.constant 0 : index
    %c0_5 = arith.constant 0 : index
    %c0_6 = arith.constant 0 : index
    %6 = vector.load %arg2[%c0_4, %c0_5, %c0_6] : memref<3x128x128xf32, #tpu.memory_space<vmem>>, vector<1x128x128xf32>
    %7 = vector.shape_cast %6 : vector<1x128x128xf32> to vector<128x128xf32>
    %cst_7 = arith.constant dense<0.000000e+00> : vector<64x128xf32>
    %8 = tpu.matmul %5, %7, %cst_7 {dimension_numbers = #tpu.dot_dimension_numbers<[1], [0], [0], [1], [0, 0, 1, 1], [], []>} : vector<64x128xf32>, vector<128x128xf32>, vector<64x128xf32> -> vector<64x128xf32>
    %c0_8 = arith.constant 0 : index
    %c0_9 = arith.constant 0 : index
    %c0_10 = arith.constant 0 : index
    %9 = vector.load %arg4[%c0_8, %c0_9, %c0_10] : memref<6x1x128xf32, #tpu.memory_space<vmem>>, vector<1x1x128xf32>
    %10 = vector.shape_cast %9 : vector<1x1x128xf32> to vector<1x128xf32>
    %11 = vector.broadcast %10 : vector<1x128xf32> to vector<64x128xf32>
    %12 = arith.addf %8, %11 : vector<64x128xf32>
    %cst_11 = arith.constant 0.000000e+00 : f32
    %13 = vector.broadcast %cst_11 : f32 to vector<64x128xf32>
    %14 = arith.maximumf %12, %13 : vector<64x128xf32>
    %c1 = arith.constant 1 : index
    %c0_12 = arith.constant 0 : index
    %c0_13 = arith.constant 0 : index
    %15 = vector.load %arg1[%c1, %c0_12, %c0_13] : memref<3x64x64xf32, #tpu.memory_space<vmem>>, vector<1x64x64xf32>
    %16 = vector.shape_cast %15 : vector<1x64x64xf32> to vector<64x64xf32>
    %cst_14 = arith.constant dense<0.000000e+00> : vector<64x128xf32>
    %17 = tpu.matmul %16, %14, %cst_14 {dimension_numbers = #tpu.dot_dimension_numbers<[1], [0], [0], [1], [0, 0, 1, 1], [], []>} : vector<64x64xf32>, vector<64x128xf32>, vector<64x128xf32> -> vector<64x128xf32>
    %c64_i32_15 = arith.constant 64 : i32
    %18 = tpu.dynamic_rotate %14 by %c64_i32_15 dim 1 : vector<64x128xf32>, i32 -> vector<64x128xf32>
    %19 = arith.addf %17, %18 : vector<64x128xf32>
    %c1_16 = arith.constant 1 : index
    %c0_17 = arith.constant 0 : index
    %c0_18 = arith.constant 0 : index
    %20 = vector.load %arg2[%c1_16, %c0_17, %c0_18] : memref<3x128x128xf32, #tpu.memory_space<vmem>>, vector<1x128x128xf32>
    %21 = vector.shape_cast %20 : vector<1x128x128xf32> to vector<128x128xf32>
    %cst_19 = arith.constant dense<0.000000e+00> : vector<64x128xf32>
    %22 = tpu.matmul %19, %21, %cst_19 {dimension_numbers = #tpu.dot_dimension_numbers<[1], [0], [0], [1], [0, 0, 1, 1], [], []>} : vector<64x128xf32>, vector<128x128xf32>, vector<64x128xf32> -> vector<64x128xf32>
    %c1_20 = arith.constant 1 : index
    %c0_21 = arith.constant 0 : index
    %c0_22 = arith.constant 0 : index
    %23 = vector.load %arg4[%c1_20, %c0_21, %c0_22] : memref<6x1x128xf32, #tpu.memory_space<vmem>>, vector<1x1x128xf32>
    %24 = vector.shape_cast %23 : vector<1x1x128xf32> to vector<1x128xf32>
    %25 = vector.broadcast %24 : vector<1x128xf32> to vector<64x128xf32>
    %26 = arith.addf %22, %25 : vector<64x128xf32>
    %cst_23 = arith.constant 0.000000e+00 : f32
    %27 = vector.broadcast %cst_23 : f32 to vector<64x128xf32>
    %28 = arith.maximumf %26, %27 : vector<64x128xf32>
    %c2 = arith.constant 2 : index
    %c0_24 = arith.constant 0 : index
    %c0_25 = arith.constant 0 : index
    %29 = vector.load %arg1[%c2, %c0_24, %c0_25] : memref<3x64x64xf32, #tpu.memory_space<vmem>>, vector<1x64x64xf32>
    %30 = vector.shape_cast %29 : vector<1x64x64xf32> to vector<64x64xf32>
    %cst_26 = arith.constant dense<0.000000e+00> : vector<64x128xf32>
    %31 = tpu.matmul %30, %28, %cst_26 {dimension_numbers = #tpu.dot_dimension_numbers<[1], [0], [0], [1], [0, 0, 1, 1], [], []>} : vector<64x64xf32>, vector<64x128xf32>, vector<64x128xf32> -> vector<64x128xf32>
    %c64_i32_27 = arith.constant 64 : i32
    %32 = tpu.dynamic_rotate %28 by %c64_i32_27 dim 1 : vector<64x128xf32>, i32 -> vector<64x128xf32>
    %33 = arith.addf %31, %32 : vector<64x128xf32>
    %c2_28 = arith.constant 2 : index
    %c0_29 = arith.constant 0 : index
    %c0_30 = arith.constant 0 : index
    %34 = vector.load %arg2[%c2_28, %c0_29, %c0_30] : memref<3x128x128xf32, #tpu.memory_space<vmem>>, vector<1x128x128xf32>
    %35 = vector.shape_cast %34 : vector<1x128x128xf32> to vector<128x128xf32>
    %cst_31 = arith.constant dense<0.000000e+00> : vector<64x128xf32>
    %36 = tpu.matmul %33, %35, %cst_31 {dimension_numbers = #tpu.dot_dimension_numbers<[1], [0], [0], [1], [0, 0, 1, 1], [], []>} : vector<64x128xf32>, vector<128x128xf32>, vector<64x128xf32> -> vector<64x128xf32>
    %c2_32 = arith.constant 2 : index
    %c0_33 = arith.constant 0 : index
    %c0_34 = arith.constant 0 : index
    %37 = vector.load %arg4[%c2_32, %c0_33, %c0_34] : memref<6x1x128xf32, #tpu.memory_space<vmem>>, vector<1x1x128xf32>
    %38 = vector.shape_cast %37 : vector<1x1x128xf32> to vector<1x128xf32>
    %39 = vector.broadcast %38 : vector<1x128xf32> to vector<64x128xf32>
    %40 = arith.addf %36, %39 : vector<64x128xf32>
    %c0_35 = arith.constant 0 : index
    %c0_36 = arith.constant 0 : index
    %c0_37 = arith.constant 0 : index
    %41 = vector.load %arg5[%c0_35, %c0_36, %c0_37] : memref<2x32x64xf32, #tpu.memory_space<vmem>>, vector<1x32x64xf32>
    %42 = vector.shape_cast %41 : vector<1x32x64xf32> to vector<32x64xf32>
    %cst_38 = arith.constant dense<0.000000e+00> : vector<32x128xf32>
    %43 = tpu.matmul %42, %40, %cst_38 {dimension_numbers = #tpu.dot_dimension_numbers<[1], [0], [0], [1], [0, 0, 1, 1], [], []>} : vector<32x64xf32>, vector<64x128xf32>, vector<32x128xf32> -> vector<32x128xf32>
    %c1_39 = arith.constant 1 : index
    %c0_40 = arith.constant 0 : index
    %c0_41 = arith.constant 0 : index
    %44 = vector.load %arg5[%c1_39, %c0_40, %c0_41] : memref<2x32x64xf32, #tpu.memory_space<vmem>>, vector<1x32x64xf32>
    %45 = vector.shape_cast %44 : vector<1x32x64xf32> to vector<32x64xf32>
    %cst_42 = arith.constant dense<0.000000e+00> : vector<32x128xf32>
    %46 = tpu.matmul %45, %40, %cst_42 {dimension_numbers = #tpu.dot_dimension_numbers<[1], [0], [0], [1], [0, 0, 1, 1], [], []>} : vector<32x64xf32>, vector<64x128xf32>, vector<32x128xf32> -> vector<32x128xf32>
    %47 = arith.mulf %43, %46 : vector<32x128xf32>
    %c0_43 = arith.constant 0 : index
    %c0_44 = arith.constant 0 : index
    %c0_45 = arith.constant 0 : index
    %48 = vector.load %arg3[%c0_43, %c0_44, %c0_45] : memref<3x128x128xf32, #tpu.memory_space<vmem>>, vector<1x128x128xf32>
    %49 = vector.shape_cast %48 : vector<1x128x128xf32> to vector<128x128xf32>
    %cst_46 = arith.constant dense<0.000000e+00> : vector<32x128xf32>
    %50 = tpu.matmul %47, %49, %cst_46 {dimension_numbers = #tpu.dot_dimension_numbers<[1], [0], [0], [1], [0, 0, 1, 1], [], []>} : vector<32x128xf32>, vector<128x128xf32>, vector<32x128xf32> -> vector<32x128xf32>
    %c3 = arith.constant 3 : index
    %c0_47 = arith.constant 0 : index
    %c0_48 = arith.constant 0 : index
    %51 = vector.load %arg4[%c3, %c0_47, %c0_48] : memref<6x1x128xf32, #tpu.memory_space<vmem>>, vector<1x1x128xf32>
    %52 = vector.shape_cast %51 : vector<1x1x128xf32> to vector<1x128xf32>
    %53 = vector.broadcast %52 : vector<1x128xf32> to vector<32x128xf32>
    %54 = arith.addf %50, %53 : vector<32x128xf32>
    %cst_49 = arith.constant 0.000000e+00 : f32
    %55 = vector.broadcast %cst_49 : f32 to vector<32x128xf32>
    %56 = arith.maximumf %54, %55 : vector<32x128xf32>
    %c1_50 = arith.constant 1 : index
    %c0_51 = arith.constant 0 : index
    %c0_52 = arith.constant 0 : index
    %57 = vector.load %arg3[%c1_50, %c0_51, %c0_52] : memref<3x128x128xf32, #tpu.memory_space<vmem>>, vector<1x128x128xf32>
    %58 = vector.shape_cast %57 : vector<1x128x128xf32> to vector<128x128xf32>
    %cst_53 = arith.constant dense<0.000000e+00> : vector<32x128xf32>
    %59 = tpu.matmul %56, %58, %cst_53 {dimension_numbers = #tpu.dot_dimension_numbers<[1], [0], [0], [1], [0, 0, 1, 1], [], []>} : vector<32x128xf32>, vector<128x128xf32>, vector<32x128xf32> -> vector<32x128xf32>
    %c4 = arith.constant 4 : index
    %c0_54 = arith.constant 0 : index
    %c0_55 = arith.constant 0 : index
    %60 = vector.load %arg4[%c4, %c0_54, %c0_55] : memref<6x1x128xf32, #tpu.memory_space<vmem>>, vector<1x1x128xf32>
    %61 = vector.shape_cast %60 : vector<1x1x128xf32> to vector<1x128xf32>
    %62 = vector.broadcast %61 : vector<1x128xf32> to vector<32x128xf32>
    %63 = arith.addf %59, %62 : vector<32x128xf32>
    %cst_56 = arith.constant 0.000000e+00 : f32
    %64 = vector.broadcast %cst_56 : f32 to vector<32x128xf32>
    %65 = arith.maximumf %63, %64 : vector<32x128xf32>
    %c2_57 = arith.constant 2 : index
    %c0_58 = arith.constant 0 : index
    %c0_59 = arith.constant 0 : index
    %66 = vector.load %arg3[%c2_57, %c0_58, %c0_59] : memref<3x128x128xf32, #tpu.memory_space<vmem>>, vector<1x128x128xf32>
    %67 = vector.shape_cast %66 : vector<1x128x128xf32> to vector<128x128xf32>
    %cst_60 = arith.constant dense<0.000000e+00> : vector<32x128xf32>
    %68 = tpu.matmul %65, %67, %cst_60 {dimension_numbers = #tpu.dot_dimension_numbers<[1], [0], [0], [1], [0, 0, 1, 1], [], []>} : vector<32x128xf32>, vector<128x128xf32>, vector<32x128xf32> -> vector<32x128xf32>
    %c5 = arith.constant 5 : index
    %c0_61 = arith.constant 0 : index
    %c0_62 = arith.constant 0 : index
    %69 = vector.load %arg4[%c5, %c0_61, %c0_62] : memref<6x1x128xf32, #tpu.memory_space<vmem>>, vector<1x1x128xf32>
    %70 = vector.shape_cast %69 : vector<1x1x128xf32> to vector<1x128xf32>
    %71 = vector.broadcast %70 : vector<1x128xf32> to vector<32x128xf32>
    %72 = arith.addf %68, %71 : vector<32x128xf32>
    %c0_63 = arith.constant 0 : index
    %c0_64 = arith.constant 0 : index
    %73 = vector.load %arg6[%c0_63, %c0_64] : memref<32x128xf32, #tpu.memory_space<vmem>>, vector<32x128xf32>
    tpu.vector_store %arg6[%c0_63, %c0_64], %72 {strides = array<i32>} : memref<32x128xf32, #tpu.memory_space<vmem>>, vector<32x128xf32>,
    return
  }
}

</mosaic_0001>

<llo_original>
// kernel: tpu_custom_call.1
$region0: #{tpu_custom_call.1}
  #allocation0 [shape = 'u32[]', space=smem, size = 0x4, offset = 0x4, fixed_abs, tag = 'smem constant byte address 0x4 - core index']
  #allocation1 [shape = 'u32[144,128]{1,0:T(1,128)}', space=vmem, size = 0x12000, scoped, tag = 'internal scratch']
  %s0 = inlined_call_operand.hbm [shape: f32[64,128], index: 0, kind: input, shape index: {}]
  %s1 = inlined_call_operand.hbm [shape: f32[3,64,64], index: 1, kind: input, shape index: {}]
  %s2 = inlined_call_operand.hbm [shape: f32[3,128,128], index: 2, kind: input, shape index: {}]
  %s3 = inlined_call_operand.hbm [shape: f32[3,128,128], index: 3, kind: input, shape index: {}]
  %s4 = inlined_call_operand.vmem [shape: f32[6,1,128], index: 4, kind: input, shape index: {}]
  %s5 = inlined_call_operand.hbm [shape: f32[2,32,64], index: 5, kind: input, shape index: {}]
  %s6 = inlined_call_operand.hbm [shape: f32[32,128], index: 6, kind: output, shape index: {}]
  %s7 = sld [smem:[#allocation0]]
  $region54: #{tpu_custom_call.1} parent=0
    _
  %s9 = ssub.s32 1, %s7
  %s10 = scalar_select 0, %s9, %s7
  $region1: #{tpu_custom_call.1} parent=0
    #allocation2 [shape = 'u8[32768]{0}', space=vmem, size = 0x8000, scoped, tag = 'input window, operand 0, single buffered']
    #allocation3 [shape = 's32[1]{0}', space=sflag, size = 0x4, scoped, tag = 'scoped memory for tpu_custom_call.1']
    #allocation4 [shape = 's32[1]{0}', space=sflag, size = 0x4, scoped, tag = 'scoped memory for tpu_custom_call.1']
    #allocation5 [shape = 'u8[98304]{0}', space=vmem, size = 0x18000, scoped, tag = 'input window, operand 1, single buffered']
    #allocation6 [shape = 's32[1]{0}', space=sflag, size = 0x4, scoped, tag = 'scoped memory for tpu_custom_call.1']
    #allocation7 [shape = 'u8[196608]{0}', space=vmem, size = 0x30000, scoped, tag = 'input window, operand 2, single buffered']
    #allocation8 [shape = 'u8[196608]{0}', space=vmem, size = 0x30000, scoped, tag = 'input window, operand 3, single buffered']
    #allocation9 [shape = 's32[1]{0}', space=sflag, size = 0x4, scoped, tag = 'scoped memory for tpu_custom_call.1']
    #allocation10 [shape = 'u8[32768]{0}', space=vmem, size = 0x8000, scoped, tag = 'input window, operand 5, single buffered']
    #allocation11 [shape = 'u8[16384]{0}', space=vmem, size = 0x4000, scoped, tag = 'output window, operand 0, single buffered']
    %11 = vsyncpa [#allocation3], 0
    %12 = vsyncpa [#allocation6], 0
    %13 = vsyncpa [#allocation9], 0
    %14 = vsyncpa [#allocation4], 0
    // Predicated region
    $region2: #{tpu_custom_call.1} parent=1 // pred_check
      _
    $region3: #{tpu_custom_call.1} parent=1 // pred_check_branch
      %16 = sbr.rel (0) target = $region5
    $region4: #{tpu_custom_call.1} parent=1 // pred_region
      %s18 = ssub.s32 1024, 1024
      %19 = vsyncadd [#allocation3], %s18
      %s20 = sshll.u32 [#allocation2], 4
      %s21 = int_to_ptr.vmem [resolvable:$true] %s20
      %26 = dma.hbm_to_vmem [thread:$0]  %s0, 1024, %s21, [#allocation3], 128, 128, 8
    $region5: #{tpu_custom_call.1} parent=1 // pred_fallthru
      _
    // Predicated region
    $region6: #{tpu_custom_call.1} parent=1 // pred_check
      _
    $region7: #{tpu_custom_call.1} parent=1 // pred_check_branch
      %28 = sbr.rel (0) target = $region9
    $region8: #{tpu_custom_call.1} parent=1 // pred_region
      %s30 = ssub.s32 3072, 3072
      %31 = vsyncadd [#allocation6], %s30
      %s32 = sshll.u32 [#allocation5], 4
      %s33 = int_to_ptr.vmem [resolvable:$true] %s32
      %38 = dma.hbm_to_vmem [thread:$0]  %s1, 3072, %s33, [#allocation6], 128, 128, 8
    $region9: #{tpu_custom_call.1} parent=1 // pred_fallthru
      _
    // Predicated region
    $region10: #{tpu_custom_call.1} parent=1 // pred_check
      _
    $region11: #{tpu_custom_call.1} parent=1 // pred_check_branch
      %40 = sbr.rel (0) target = $region13
    $region12: #{tpu_custom_call.1} parent=1 // pred_region
      %s42 = ssub.s32 6144, 6144
      %43 = vsyncadd [#allocation6], %s42
      %s44 = sshll.u32 [#allocation7], 4
      %s45 = int_to_ptr.vmem [resolvable:$true] %s44
      %50 = dma.hbm_to_vmem [thread:$0]  %s2, 6144, %s45, [#allocation6], 128, 128, 8
    $region13: #{tpu_custom_call.1} parent=1 // pred_fallthru
      _
    // Predicated region
    $region14: #{tpu_custom_call.1} parent=1 // pred_check
      _
    $region15: #{tpu_custom_call.1} parent=1 // pred_check_branch
      %52 = sbr.rel (0) target = $region17
    $region16: #{tpu_custom_call.1} parent=1 // pred_region
      %s54 = ssub.s32 6144, 6144
      %55 = vsyncadd [#allocation9], %s54
      %s56 = sshll.u32 [#allocation8], 4
      %s57 = int_to_ptr.vmem [resolvable:$true] %s56
      %62 = dma.hbm_to_vmem [thread:$0]  %s3, 6144, %s57, [#allocation9], 128, 128, 8
    $region17: #{tpu_custom_call.1} parent=1 // pred_fallthru
      _
    // Predicated region
    $region18: #{tpu_custom_call.1} parent=1 // pred_check
      _
    $region19: #{tpu_custom_call.1} parent=1 // pred_check_branch
      %64 = sbr.rel (0) target = $region21
    $region20: #{tpu_custom_call.1} parent=1 // pred_region
      _
    $region21: #{tpu_custom_call.1} parent=1 // pred_fallthru
      _
    // Predicated region
    $region22: #{tpu_custom_call.1} parent=1 // pred_check
      _
    $region23: #{tpu_custom_call.1} parent=1 // pred_check_branch
      %66 = sbr.rel (0) target = $region25
    $region24: #{tpu_custom_call.1} parent=1 // pred_region
      %s68 = ssub.s32 1024, 1024
      %69 = vsyncadd [#allocation9], %s68
      %s70 = sshll.u32 [#allocation10], 4
      %s71 = int_to_ptr.vmem [resolvable:$true] %s70
      %76 = dma.hbm_to_vmem [thread:$0]  %s5, 1024, %s71, [#allocation9], 128, 128, 8
    $region25: #{tpu_custom_call.1} parent=1 // pred_fallthru
      _
    // Predicated region
    $region26: #{tpu_custom_call.1} parent=1 // pred_check
      _
    $region27: #{tpu_custom_call.1} parent=1 // pred_check_branch
      %78 = sbr.rel (0) target = $region29
    $region28: #{tpu_custom_call.1} parent=1 // pred_region
      %79 = dma.done [#allocation3], 1024
    $region29: #{tpu_custom_call.1} parent=1 // pred_fallthru
      _
    // Predicated region
    $region30: #{tpu_custom_call.1} parent=1 // pred_check
      _
    $region31: #{tpu_custom_call.1} parent=1 // pred_check_branch
      %81 = sbr.rel (0) target = $region33
    $region32: #{tpu_custom_call.1} parent=1 // pred_region
      %82 = dma.done [#allocation6], 3072
    $region33: #{tpu_custom_call.1} parent=1 // pred_fallthru
      _
    // Predicated region
    $region34: #{tpu_custom_call.1} parent=1 // pred_check
      _
    $region35: #{tpu_custom_call.1} parent=1 // pred_check_branch
      %84 = sbr.rel (0) target = $region37
    $region36: #{tpu_custom_call.1} parent=1 // pred_region
      %85 = dma.done [#allocation6], 6144
    $region37: #{tpu_custom_call.1} parent=1 // pred_fallthru
      _
    // Predicated region
    $region38: #{tpu_custom_call.1} parent=1 // pred_check
      _
    $region39: #{tpu_custom_call.1} parent=1 // pred_check_branch
      %87 = sbr.rel (0) target = $region41
    $region40: #{tpu_custom_call.1} parent=1 // pred_region
      %88 = dma.done [#allocation9], 6144
    $region41: #{tpu_custom_call.1} parent=1 // pred_fallthru
      _
    // Predicated region
    $region42: #{tpu_custom_call.1} parent=1 // pred_check
      _
    $region43: #{tpu_custom_call.1} parent=1 // pred_check_branch
      %90 = sbr.rel (0) target = $region45
    $region44: #{tpu_custom_call.1} parent=1 // pred_region
      %91 = dma.done [#allocation9], 1024
    $region45: #{tpu_custom_call.1} parent=1 // pred_fallthru
      _
    %v92 = vld [vmem:[#allocation2] sm:$0xff]
    %v93 = vld [vmem:[#allocation2 + $0x8] sm:$0xff]
    %v94 = vld [vmem:[#allocation2 + $0x10] sm:$0xff]
    %v95 = vld [vmem:[#allocation2 + $0x18] sm:$0xff]
    %v96 = vld [vmem:[#allocation2 + $0x20] sm:$0xff]
    %v97 = vld [vmem:[#allocation2 + $0x28] sm:$0xff]
    %v98 = vld [vmem:[#allocation2 + $0x30] sm:$0xff]
    %v99 = vld [vmem:[#allocation2 + $0x38] sm:$0xff]
    %v100 = vld [vmem:[#allocation5] sm:$0xff]
    %v101 = vld [vmem:[#allocation5 + $0x8] sm:$0xff]
    %v102 = vld [vmem:[#allocation5 + $0x10] sm:$0xff]
    %v103 = vld [vmem:[#allocation5 + $0x18] sm:$0xff]
    %v104 = vld [vmem:[#allocation5 + $0x20] sm:$0xff]
    %v105 = vld [vmem:[#allocation5 + $0x28] sm:$0xff]
    %v106 = vld [vmem:[#allocation5 + $0x30] sm:$0xff]
    %v107 = vld [vmem:[#allocation5 + $0x38] sm:$0xff]
    %108 = vrot.lane.b32.xlu0 %v92, 64
    %v109 = vpop.permute.xlu0 %108
    %110 = vrot.lane.b32.xlu0 %v93, 64
    %v111 = vpop.permute.xlu0 %110
    %112 = vrot.lane.b32.xlu0 %v94, 64
    %v113 = vpop.permute.xlu0 %112
    %114 = vrot.lane.b32.xlu0 %v95, 64
    %v115 = vpop.permute.xlu0 %114
    %116 = vrot.lane.b32.xlu0 %v96, 64
    %v117 = vpop.permute.xlu0 %116
    %118 = vrot.lane.b32.xlu0 %v97, 64
    %v119 = vpop.permute.xlu0 %118
    %120 = vrot.lane.b32.xlu0 %v98, 64
    %v121 = vpop.permute.xlu0 %120
    %122 = vrot.lane.b32.xlu0 %v99, 64
    %v123 = vpop.permute.xlu0 %122
    %vm124 = vcmask 523264
    %v126 = vsel %vm124, %v100, 0
    %v129 = vsel %vm124, %v101, 0
    %v132 = vsel %vm124, %v102, 0
    %v135 = vsel %vm124, %v103, 0
    %v138 = vsel %vm124, %v104, 0
    %v141 = vsel %vm124, %v105, 0
    %v144 = vsel %vm124, %v106, 0
    %v147 = vsel %vm124, %v107, 0
    %149 = vmatprep.subr.mxu0 0.0
    %150 = vmatpush1.msra.mxu0 0.0
    %151 = vmatprep.subr.mxu0 0.0
    %152 = vmatpush1.msra.mxu0 0.0
    %153 = vmatprep.subr.mxu0 0.0
    %154 = vmatpush1.msra.mxu0 0.0
    %155 = vmatprep.subr.mxu0 0.0
    %156 = vmatpush1.msra.mxu0 0.0
    %157 = vmatprep.subr.mxu0 0.0
    %158 = vmatpush1.msra.mxu0 0.0
    %159 = vmatprep.subr.mxu0 0.0
    %160 = vmatpush1.msra.mxu0 0.0
    %161 = vmatprep.subr.mxu0 0.0
    %162 = vmatpush1.msra.mxu0 0.0
    %163 = vmatprep.subr.mxu0 0.0
    %164 = vmatpush1.msra.mxu0 0.0
    %165 = vmatprep.subr.mxu0 0.0
    %166 = vmatpush1.msra.mxu0 %v99
    %167 = vmatprep.subr.mxu0 0.0
    %168 = vmatpush1.msra.mxu0 %v98
    %169 = vmatprep.subr.mxu0 0.0
    %170 = vmatpush1.msra.mxu0 %v97
    %171 = vmatprep.subr.mxu0 0.0
    %172 = vmatpush1.msra.mxu0 %v96
    %173 = vmatprep.subr.mxu0 0.0
    %174 = vmatpush1.msra.mxu0 %v95
    %175 = vmatprep.subr.mxu0 0.0
    %176 = vmatpush1.msra.mxu0 %v94
    %177 = vmatprep.subr.mxu0 0.0
    %178 = vmatpush1.msra.mxu0 %v93
    %179 = vmatprep.subr.mxu0 0.0
    %180 = vmatpush1.msra.mxu0 %v92
    %181 = vmatprep.subr.mxu0 0.0
    %182 = vmatpush2.msra.mxu0 0.0
    %183 = vmatprep.subr.mxu0 0.0
    %184 = vmatpush2.msra.mxu0 0.0
    %185 = vmatprep.subr.mxu0 0.0
    %186 = vmatpush2.msra.mxu0 0.0
    %187 = vmatprep.subr.mxu0 0.0
    %188 = vmatpush2.msra.mxu0 0.0
    %189 = vmatprep.subr.mxu0 0.0
    %190 = vmatpush2.msra.mxu0 0.0
    %191 = vmatprep.subr.mxu0 0.0
    %192 = vmatpush2.msra.mxu0 0.0
    %193 = vmatprep.subr.mxu0 0.0
    %194 = vmatpush2.msra.mxu0 0.0
    %195 = vmatprep.subr.mxu0 0.0
    %196 = vmatpush2.msra.mxu0 0.0
    %197 = vmatprep.subr.mxu0 0.0
    %198 = vmatpush2.msra.mxu0 0.0
    %199 = vmatprep.subr.mxu0 0.0
    %200 = vmatpush2.msra.mxu0 0.0
    %201 = vmatprep.subr.mxu0 0.0
    %202 = vmatpush2.msra.mxu0 0.0
    %203 = vmatprep.subr.mxu0 0.0
    %204 = vmatpush2.msra.mxu0 0.0
    %205 = vmatprep.subr.mxu0 0.0
    %206 = vmatpush2.msra.mxu0 0.0
    %207 = vmatprep.subr.mxu0 0.0
    %208 = vmatpush2.msra.mxu0 0.0
    %209 = vmatprep.subr.mxu0 0.0
    %210 = vmatpush2.msra.mxu0 0.0
    %211 = vmatprep.subr.mxu0 0.0
    %212 = vmatpush2.msra.mxu0 0.0
    %213 = vmatprep.mubr.f32.mxu0 0.0
    %214 = vmatmul.mubr.f32.gmra.mxu0 %v126
    %v215 = vpop.f32.mrf.mxu0
    %v216 = vadd.f32 %v109, %v215
    %v217 = vpop.f32.mrf.mxu0
    %218 = vmatprep.mubr.f32.mxu0 0.0
    %219 = vmatmul.mubr.f32.gmra.mxu0 %v129
    %v220 = vpop.f32.mrf.mxu0
    %v221 = vadd.f32 %v111, %v220
    %v222 = vpop.f32.mrf.mxu0
    %223 = vmatprep.mubr.f32.mxu0 0.0
    %224 = vmatmul.mubr.f32.gmra.mxu0 %v132
    %v225 = vpop.f32.mrf.mxu0
    %v226 = vadd.f32 %v113, %v225
    %v227 = vpop.f32.mrf.mxu0
    %228 = vmatprep.mubr.f32.mxu0 0.0
    %229 = vmatmul.mubr.f32.gmra.mxu0 %v135
    %v230 = vpop.f32.mrf.mxu0
    %v231 = vadd.f32 %v115, %v230
    %v232 = vpop.f32.mrf.mxu0
    %233 = vmatprep.mubr.f32.mxu0 0.0
    %234 = vmatmul.mubr.f32.gmra.mxu0 %v138
    %v235 = vpop.f32.mrf.mxu0
    %v236 = vadd.f32 %v117, %v235
    %v237 = vpop.f32.mrf.mxu0
    %238 = vmatprep.mubr.f32.mxu0 0.0
    %239 = vmatmul.mubr.f32.gmra.mxu0 %v141
    %v240 = vpop.f32.mrf.mxu0
    %v241 = vadd.f32 %v119, %v240
    %v242 = vpop.f32.mrf.mxu0
    %243 = vmatprep.mubr.f32.mxu0 0.0
    %244 = vmatmul.mubr.f32.gmra.mxu0 %v144
    %v245 = vpop.f32.mrf.mxu0
    %v246 = vadd.f32 %v121, %v245
    %v247 = vpop.f32.mrf.mxu0
    %248 = vmatprep.mubr.f32.mxu0 0.0
    %249 = vmatmul.mubr.f32.gmra.mxu0 %v147
    %v250 = vpop.f32.mrf.mxu0
    %v251 = vadd.f32 %v123, %v250
    %v252 = vpop.f32.mrf.mxu0
    %253 = vdwg.mxu0
    %v254 = vld [vmem:[#allocation7] sm:$0xff]
    %v255 = vld [vmem:[#allocation7 + $0x8] sm:$0xff]
    %v256 = vld [vmem:[#allocation7 + $0x10] sm:$0xff]
    %v257 = vld [vmem:[#allocation7 + $0x18] sm:$0xff]
    %v258 = vld [vmem:[#allocation7 + $0x20] sm:$0xff]
    %v259 = vld [vmem:[#allocation7 + $0x28] sm:$0xff]
    %v260 = vld [vmem:[#allocation7 + $0x30] sm:$0xff]
    %v261 = vld [vmem:[#allocation7 + $0x38] sm:$0xff]
    %v262 = vld [vmem:[#allocation7 + $0x40] sm:$0xff]
    %v263 = vld [vmem:[#allocation7 + $0x48] sm:$0xff]
    %v264 = vld [vmem:[#allocation7 + $0x50] sm:$0xff]
    %v265 = vld [vmem:[#allocation7 + $0x58] sm:$0xff]
    %v266 = vld [vmem:[#allocation7 + $0x60] sm:$0xff]
    %v267 = vld [vmem:[#allocation7 + $0x68] sm:$0xff]
    %v268 = vld [vmem:[#allocation7 + $0x70] sm:$0xff]
    %v269 = vld [vmem:[#allocation7 + $0x78] sm:$0xff]
    %v270 = vld [vmem:[%s4] sm:$0x1]
    %v272 = vlaneseq
    %v273 = vshrl.u32 %v272, 7
    %v274 = vsub.s32 0, %v273
    %v275 = vrot.slane %v270, %v274
    %277 = vmatprep.subr.mxu0 0.0
    %278 = vmatpush1.msra.mxu0 %v269
    %279 = vmatprep.subr.mxu0 0.0
    %280 = vmatpush1.msra.mxu0 %v268
    %281 = vmatprep.subr.mxu0 0.0
    %282 = vmatpush1.msra.mxu0 %v267
    %283 = vmatprep.subr.mxu0 0.0
    %284 = vmatpush1.msra.mxu0 %v266
    %285 = vmatprep.subr.mxu0 0.0
    %286 = vmatpush1.msra.mxu0 %v265
    %287 = vmatprep.subr.mxu0 0.0
    %288 = vmatpush1.msra.mxu0 %v264
    %289 = vmatprep.subr.mxu0 0.0
    %290 = vmatpush1.msra.mxu0 %v263
    %291 = vmatprep.subr.mxu0 0.0
    %292 = vmatpush1.msra.mxu0 %v262
    %293 = vmatprep.subr.mxu0 0.0
    %294 = vmatpush1.msra.mxu0 %v261
    %295 = vmatprep.subr.mxu0 0.0
    %296 = vmatpush1.msra.mxu0 %v260
    %297 = vmatprep.subr.mxu0 0.0
    %298 = vmatpush1.msra.mxu0 %v259
    %299 = vmatprep.subr.mxu0 0.0
    %300 = vmatpush1.msra.mxu0 %v258
    %301 = vmatprep.subr.mxu0 0.0
    %302 = vmatpush1.msra.mxu0 %v257
    %303 = vmatprep.subr.mxu0 0.0
    %304 = vmatpush1.msra.mxu0 %v256
    %305 = vmatprep.subr.mxu0 0.0
    %306 = vmatpush1.msra.mxu0 %v255
    %307 = vmatprep.subr.mxu0 0.0
    %308 = vmatpush1.msra.mxu0 %v254
    %309 = vmatprep.subr.mxu0 0.0
    %310 = vmatpush2.msra.mxu0 0.0
    %311 = vmatprep.subr.mxu0 0.0
    %312 = vmatpush2.msra.mxu0 0.0
    %313 = vmatprep.subr.mxu0 0.0
    %314 = vmatpush2.msra.mxu0 0.0
    %315 = vmatprep.subr.mxu0 0.0
    %316 = vmatpush2.msra.mxu0 0.0
    %317 = vmatprep.subr.mxu0 0.0
    %318 = vmatpush2.msra.mxu0 0.0
    %319 = vmatprep.subr.mxu0 0.0
    %320 = vmatpush2.msra.mxu0 0.0
    %321 = vmatprep.subr.mxu0 0.0
    %322 = vmatpush2.msra.mxu0 0.0
    %323 = vmatprep.subr.mxu0 0.0
    %324 = vmatpush2.msra.mxu0 0.0
    %325 = vmatprep.subr.mxu0 0.0
    %326 = vmatpush2.msra.mxu0 0.0
    %327 = vmatprep.subr.mxu0 0.0
    %328 = vmatpush2.msra.mxu0 0.0
    %329 = vmatprep.subr.mxu0 0.0
    %330 = vmatpush2.msra.mxu0 0.0
    %331 = vmatprep.subr.mxu0 0.0
    %332 = vmatpush2.msra.mxu0 0.0
    %333 = vmatprep.subr.mxu0 0.0
    %334 = vmatpush2.msra.mxu0 0.0
    %335 = vmatprep.subr.mxu0 0.0
    %336 = vmatpush2.msra.mxu0 0.0
    %337 = vmatprep.subr.mxu0 0.0
    %338 = vmatpush2.msra.mxu0 0.0
    %339 = vmatprep.subr.mxu0 0.0
    %340 = vmatpush2.msra.mxu0 0.0
    %341 = vmatprep.mubr.f32.mxu0 0.0
    %342 = vmatmul.mubr.f32.gmra.mxu0 %v216
    %v343 = vpop.f32.mrf.mxu0
    %v344 = vadd.f32 %v275, %v343
    %v345 = vpop.f32.mrf.mxu0
    %346 = vmatprep.mubr.f32.mxu0 0.0
    %347 = vmatmul.mubr.f32.gmra.mxu0 %v221
    %v348 = vpop.f32.mrf.mxu0
    %v349 = vadd.f32 %v275, %v348
    %v350 = vpop.f32.mrf.mxu0
    %351 = vmatprep.mubr.f32.mxu0 0.0
    %352 = vmatmul.mubr.f32.gmra.mxu0 %v226
    %v353 = vpop.f32.mrf.mxu0
    %v354 = vadd.f32 %v275, %v353
    %v355 = vpop.f32.mrf.mxu0
    %356 = vmatprep.mubr.f32.mxu0 0.0
    %357 = vmatmul.mubr.f32.gmra.mxu0 %v231
    %v358 = vpop.f32.mrf.mxu0
    %v359 = vadd.f32 %v275, %v358
    %v360 = vpop.f32.mrf.mxu0
    %361 = vmatprep.mubr.f32.mxu0 0.0
    %362 = vmatmul.mubr.f32.gmra.mxu0 %v236
    %v363 = vpop.f32.mrf.mxu0
    %v364 = vadd.f32 %v275, %v363
    %v365 = vpop.f32.mrf.mxu0
    %366 = vmatprep.mubr.f32.mxu0 0.0
    %367 = vmatmul.mubr.f32.gmra.mxu0 %v241
    %v368 = vpop.f32.mrf.mxu0
    %v369 = vadd.f32 %v275, %v368
    %v370 = vpop.f32.mrf.mxu0
    %371 = vmatprep.mubr.f32.mxu0 0.0
    %372 = vmatmul.mubr.f32.gmra.mxu0 %v246
    %v373 = vpop.f32.mrf.mxu0
    %v374 = vadd.f32 %v275, %v373
    %v375 = vpop.f32.mrf.mxu0
    %376 = vmatprep.mubr.f32.mxu0 0.0
    %377 = vmatmul.mubr.f32.gmra.mxu0 %v251
    %v378 = vpop.f32.mrf.mxu0
    %v379 = vadd.f32 %v275, %v378
    %v380 = vpop.f32.mrf.mxu0
    %381 = vdwg.mxu0
    %v382 = vmax.f32 %v344, 0.0
    %v383 = vmax.f32 %v349, 0.0
    %v384 = vmax.f32 %v354, 0.0
    %v385 = vmax.f32 %v359, 0.0
    %v386 = vmax.f32 %v364, 0.0
    %v387 = vmax.f32 %v369, 0.0
    %v388 = vmax.f32 %v374, 0.0
    %v389 = vmax.f32 %v379, 0.0
    %s390 = scalar_lea.vmem [#allocation5], 64
    %v391 = vld [vmem:[%s390] sm:$0xff]
    %v392 = vld [vmem:[%s390 + $0x8] sm:$0xff]
    %v393 = vld [vmem:[%s390 + $0x10] sm:$0xff]
    %v394 = vld [vmem:[%s390 + $0x18] sm:$0xff]
    %v395 = vld [vmem:[%s390 + $0x20] sm:$0xff]
    %v396 = vld [vmem:[%s390 + $0x28] sm:$0xff]
    %v397 = vld [vmem:[%s390 + $0x30] sm:$0xff]
    %v398 = vld [vmem:[%s390 + $0x38] sm:$0xff]
    %399 = vrot.lane.b32.xlu0 %v382, 64
    %v400 = vpop.permute.xlu0 %399
    %401 = vrot.lane.b32.xlu0 %v383, 64
    %v402 = vpop.permute.xlu0 %401
    %403 = vrot.lane.b32.xlu0 %v384, 64
    %v404 = vpop.permute.xlu0 %403
    %405 = vrot.lane.b32.xlu0 %v385, 64
    %v406 = vpop.permute.xlu0 %405
    %407 = vrot.lane.b32.xlu0 %v386, 64
    %v408 = vpop.permute.xlu0 %407
    %409 = vrot.lane.b32.xlu0 %v387, 64
    %v410 = vpop.permute.xlu0 %409
    %411 = vrot.lane.b32.xlu0 %v388, 64
    %v412 = vpop.permute.xlu0 %411
    %413 = vrot.lane.b32.xlu0 %v389, 64
    %v414 = vpop.permute.xlu0 %413
    %v416 = vsel %vm124, %v391, 0
    %v419 = vsel %vm124, %v392, 0
    %v422 = vsel %vm124, %v393, 0
    %v425 = vsel %vm124, %v394, 0
    %v428 = vsel %vm124, %v395, 0
    %v431 = vsel %vm124, %v396, 0
    %v434 = vsel %vm124, %v397, 0
    %v437 = vsel %vm124, %v398, 0
    %439 = vmatprep.subr.mxu0 0.0
    %440 = vmatpush1.msra.mxu0 0.0
    %441 = vmatprep.subr.mxu0 0.0
    %442 = vmatpush1.msra.mxu0 0.0
    %443 = vmatprep.subr.mxu0 0.0
    %444 = vmatpush1.msra.mxu0 0.0
    %445 = vmatprep.subr.mxu0 0.0
    %446 = vmatpush1.msra.mxu0 0.0
    %447 = vmatprep.subr.mxu0 0.0
    %448 = vmatpush1.msra.mxu0 0.0
    %449 = vmatprep.subr.mxu0 0.0
    %450 = vmatpush1.msra.mxu0 0.0
    %451 = vmatprep.subr.mxu0 0.0
    %452 = vmatpush1.msra.mxu0 0.0
    %453 = vmatprep.subr.mxu0 0.0
    %454 = vmatpush1.msra.mxu0 0.0
    %455 = vmatprep.subr.mxu0 0.0
    %456 = vmatpush1.msra.mxu0 %v389
    %457 = vmatprep.subr.mxu0 0.0
    %458 = vmatpush1.msra.mxu0 %v388
    %459 = vmatprep.subr.mxu0 0.0
    %460 = vmatpush1.msra.mxu0 %v387
    %461 = vmatprep.subr.mxu0 0.0
    %462 = vmatpush1.msra.mxu0 %v386
    %463 = vmatprep.subr.mxu0 0.0
    %464 = vmatpush1.msra.mxu0 %v385
    %465 = vmatprep.subr.mxu0 0.0
    %466 = vmatpush1.msra.mxu0 %v384
    %467 = vmatprep.subr.mxu0 0.0
    %468 = vmatpush1.msra.mxu0 %v383
    %469 = vmatprep.subr.mxu0 0.0
    %470 = vmatpush1.msra.mxu0 %v382
    %471 = vmatprep.subr.mxu0 0.0
    %472 = vmatpush2.msra.mxu0 0.0
    %473 = vmatprep.subr.mxu0 0.0
    %474 = vmatpush2.msra.mxu0 0.0
    %475 = vmatprep.subr.mxu0 0.0
    %476 = vmatpush2.msra.mxu0 0.0
    %477 = vmatprep.subr.mxu0 0.0
    %478 = vmatpush2.msra.mxu0 0.0
    %479 = vmatprep.subr.mxu0 0.0
    %480 = vmatpush2.msra.mxu0 0.0
    %481 = vmatprep.subr.mxu0 0.0
    %482 = vmatpush2.msra.mxu0 0.0
    %483 = vmatprep.subr.mxu0 0.0
    %484 = vmatpush2.msra.mxu0 0.0
    %485 = vmatprep.subr.mxu0 0.0
    %486 = vmatpush2.msra.mxu0 0.0
    %487 = vmatprep.subr.mxu0 0.0
    %488 = vmatpush2.msra.mxu0 0.0
    %489 = vmatprep.subr.mxu0 0.0
    %490 = vmatpush2.msra.mxu0 0.0
    %491 = vmatprep.subr.mxu0 0.0
    %492 = vmatpush2.msra.mxu0 0.0
    %493 = vmatprep.subr.mxu0 0.0
    %494 = vmatpush2.msra.mxu0 0.0
    %495 = vmatprep.subr.mxu0 0.0
    %496 = vmatpush2.msra.mxu0 0.0
    %497 = vmatprep.subr.mxu0 0.0
    %498 = vmatpush2.msra.mxu0 0.0
    %499 = vmatprep.subr.mxu0 0.0
    %500 = vmatpush2.msra.mxu0 0.0
    %501 = vmatprep.subr.mxu0 0.0
    %502 = vmatpush2.msra.mxu0 0.0
    %503 = vmatprep.mubr.f32.mxu0 0.0
    %504 = vmatmul.mubr.f32.gmra.mxu0 %v416
    %v505 = vpop.f32.mrf.mxu0
    %v506 = vadd.f32 %v400, %v505
    %v507 = vpop.f32.mrf.mxu0
    %508 = vmatprep.mubr.f32.mxu0 0.0
    %509 = vmatmul.mubr.f32.gmra.mxu0 %v419
    %v510 = vpop.f32.mrf.mxu0
    %v511 = vadd.f32 %v402, %v510
    %v512 = vpop.f32.mrf.mxu0
    %513 = vmatprep.mubr.f32.mxu0 0.0
    %514 = vmatmul.mubr.f32.gmra.mxu0 %v422
    %v515 = vpop.f32.mrf.mxu0
    %v516 = vadd.f32 %v404, %v515
    %v517 = vpop.f32.mrf.mxu0
    %518 = vmatprep.mubr.f32.mxu0 0.0
    %519 = vmatmul.mubr.f32.gmra.mxu0 %v425
    %v520 = vpop.f32.mrf.mxu0
    %v521 = vadd.f32 %v406, %v520
    %v522 = vpop.f32.mrf.mxu0
    %523 = vmatprep.mubr.f32.mxu0 0.0
    %524 = vmatmul.mubr.f32.gmra.mxu0 %v428
    %v525 = vpop.f32.mrf.mxu0
    %v526 = vadd.f32 %v408, %v525
    %v527 = vpop.f32.mrf.mxu0
    %528 = vmatprep.mubr.f32.mxu0 0.0
    %529 = vmatmul.mubr.f32.gmra.mxu0 %v431
    %v530 = vpop.f32.mrf.mxu0
    %v531 = vadd.f32 %v410, %v530
    %v532 = vpop.f32.mrf.mxu0
    %533 = vmatprep.mubr.f32.mxu0 0.0
    %534 = vmatmul.mubr.f32.gmra.mxu0 %v434
    %v535 = vpop.f32.mrf.mxu0
    %v536 = vadd.f32 %v412, %v535
    %v537 = vpop.f32.mrf.mxu0
    %538 = vmatprep.mubr.f32.mxu0 0.0
    %539 = vmatmul.mubr.f32.gmra.mxu0 %v437
    %v540 = vpop.f32.mrf.mxu0
    %v541 = vadd.f32 %v414, %v540
    %v542 = vpop.f32.mrf.mxu0
    %543 = vdwg.mxu0
    %s544 = scalar_lea.vmem [#allocation7], 128
    %v545 = vld [vmem:[%s544] sm:$0xff]
    %v546 = vld [vmem:[%s544 + $0x8] sm:$0xff]
    %v547 = vld [vmem:[%s544 + $0x10] sm:$0xff]
    %v548 = vld [vmem:[%s544 + $0x18] sm:$0xff]
    %v549 = vld [vmem:[%s544 + $0x20] sm:$0xff]
    %v550 = vld [vmem:[%s544 + $0x28] sm:$0xff]
    %v551 = vld [vmem:[%s544 + $0x30] sm:$0xff]
    %v552 = vld [vmem:[%s544 + $0x38] sm:$0xff]
    %v553 = vld [vmem:[%s544 + $0x40] sm:$0xff]
    %v554 = vld [vmem:[%s544 + $0x48] sm:$0xff]
    %v555 = vld [vmem:[%s544 + $0x50] sm:$0xff]
    %v556 = vld [vmem:[%s544 + $0x58] sm:$0xff]
    %v557 = vld [vmem:[%s544 + $0x60] sm:$0xff]
    %v558 = vld [vmem:[%s544 + $0x68] sm:$0xff]
    %v559 = vld [vmem:[%s544 + $0x70] sm:$0xff]
    %v560 = vld [vmem:[%s544 + $0x78] sm:$0xff]
    %s561 = scalar_lea.vmem %s4, 1
    %v562 = vld [vmem:[%s561] sm:$0x1]
    %v564 = vlaneseq
    %v565 = vshrl.u32 %v564, 7
    %v566 = vsub.s32 0, %v565
    %v567 = vrot.slane %v562, %v566
    %569 = vmatprep.subr.mxu0 0.0
    %570 = vmatpush1.msra.mxu0 %v560
    %571 = vmatprep.subr.mxu0 0.0
    %572 = vmatpush1.msra.mxu0 %v559
    %573 = vmatprep.subr.mxu0 0.0
    %574 = vmatpush1.msra.mxu0 %v558
    %575 = vmatprep.subr.mxu0 0.0
    %576 = vmatpush1.msra.mxu0 %v557
    %577 = vmatprep.subr.mxu0 0.0
    %578 = vmatpush1.msra.mxu0 %v556
    %579 = vmatprep.subr.mxu0 0.0
    %580 = vmatpush1.msra.mxu0 %v555
    %581 = vmatprep.subr.mxu0 0.0
    %582 = vmatpush1.msra.mxu0 %v554
    %583 = vmatprep.subr.mxu0 0.0
    %584 = vmatpush1.msra.mxu0 %v553
    %585 = vmatprep.subr.mxu0 0.0
    %586 = vmatpush1.msra.mxu0 %v552
    %587 = vmatprep.subr.mxu0 0.0
    %588 = vmatpush1.msra.mxu0 %v551
    %589 = vmatprep.subr.mxu0 0.0
    %590 = vmatpush1.msra.mxu0 %v550
    %591 = vmatprep.subr.mxu0 0.0
    %592 = vmatpush1.msra.mxu0 %v549
    %593 = vmatprep.subr.mxu0 0.0
    %594 = vmatpush1.msra.mxu0 %v548
    %595 = vmatprep.subr.mxu0 0.0
    %596 = vmatpush1.msra.mxu0 %v547
    %597 = vmatprep.subr.mxu0 0.0
    %598 = vmatpush1.msra.mxu0 %v546
    %599 = vmatprep.subr.mxu0 0.0
    %600 = vmatpush1.msra.mxu0 %v545
    %601 = vmatprep.subr.mxu0 0.0
    %602 = vmatpush2.msra.mxu0 0.0
    %603 = vmatprep.subr.mxu0 0.0
    %604 = vmatpush2.msra.mxu0 0.0
    %605 = vmatprep.subr.mxu0 0.0
    %606 = vmatpush2.msra.mxu0 0.0
    %607 = vmatprep.subr.mxu0 0.0
    %608 = vmatpush2.msra.mxu0 0.0
    %609 = vmatprep.subr.mxu0 0.0
    %610 = vmatpush2.msra.mxu0 0.0
    %611 = vmatprep.subr.mxu0 0.0
    %612 = vmatpush2.msra.mxu0 0.0
    %613 = vmatprep.subr.mxu0 0.0
    %614 = vmatpush2.msra.mxu0 0.0
    %615 = vmatprep.subr.mxu0 0.0
    %616 = vmatpush2.msra.mxu0 0.0
    %617 = vmatprep.subr.mxu0 0.0
    %618 = vmatpush2.msra.mxu0 0.0
    %619 = vmatprep.subr.mxu0 0.0
    %620 = vmatpush2.msra.mxu0 0.0
    %621 = vmatprep.subr.mxu0 0.0
    %622 = vmatpush2.msra.mxu0 0.0
    %623 = vmatprep.subr.mxu0 0.0
    %624 = vmatpush2.msra.mxu0 0.0
    %625 = vmatprep.subr.mxu0 0.0
    %626 = vmatpush2.msra.mxu0 0.0
    %627 = vmatprep.subr.mxu0 0.0
    %628 = vmatpush2.msra.mxu0 0.0
    %629 = vmatprep.subr.mxu0 0.0
    %630 = vmatpush2.msra.mxu0 0.0
    %631 = vmatprep.subr.mxu0 0.0
    %632 = vmatpush2.msra.mxu0 0.0
    %633 = vmatprep.mubr.f32.mxu0 0.0
    %634 = vmatmul.mubr.f32.gmra.mxu0 %v506
    %v635 = vpop.f32.mrf.mxu0
    %v636 = vadd.f32 %v567, %v635
    %v637 = vpop.f32.mrf.mxu0
    %638 = vmatprep.mubr.f32.mxu0 0.0
    %639 = vmatmul.mubr.f32.gmra.mxu0 %v511
    %v640 = vpop.f32.mrf.mxu0
    %v641 = vadd.f32 %v567, %v640
    %v642 = vpop.f32.mrf.mxu0
    %643 = vmatprep.mubr.f32.mxu0 0.0
    %644 = vmatmul.mubr.f32.gmra.mxu0 %v516
    %v645 = vpop.f32.mrf.mxu0
    %v646 = vadd.f32 %v567, %v645
    %v647 = vpop.f32.mrf.mxu0
    %648 = vmatprep.mubr.f32.mxu0 0.0
    %649 = vmatmul.mubr.f32.gmra.mxu0 %v521
    %v650 = vpop.f32.mrf.mxu0
    %v651 = vadd.f32 %v567, %v650
    %v652 = vpop.f32.mrf.mxu0
    %653 = vmatprep.mubr.f32.mxu0 0.0
    %654 = vmatmul.mubr.f32.gmra.mxu0 %v526
    %v655 = vpop.f32.mrf.mxu0
    %v656 = vadd.f32 %v567, %v655
    %v657 = vpop.f32.mrf.mxu0
    %658 = vmatprep.mubr.f32.mxu0 0.0
    %659 = vmatmul.mubr.f32.gmra.mxu0 %v531
    %v660 = vpop.f32.mrf.mxu0
    %v661 = vadd.f32 %v567, %v660
    %v662 = vpop.f32.mrf.mxu0
    %663 = vmatprep.mubr.f32.mxu0 0.0
    %664 = vmatmul.mubr.f32.gmra.mxu0 %v536
    %v665 = vpop.f32.mrf.mxu0
    %v666 = vadd.f32 %v567, %v665
    %v667 = vpop.f32.mrf.mxu0
    %668 = vmatprep.mubr.f32.mxu0 0.0
    %669 = vmatmul.mubr.f32.gmra.mxu0 %v541
    %v670 = vpop.f32.mrf.mxu0
    %v671 = vadd.f32 %v567, %v670
    %v672 = vpop.f32.mrf.mxu0
    %673 = vdwg.mxu0
    %v674 = vmax.f32 %v636, 0.0
    %v675 = vmax.f32 %v641, 0.0
    %v676 = vmax.f32 %v646, 0.0
    %v677 = vmax.f32 %v651, 0.0
    %v678 = vmax.f32 %v656, 0.0
    %v679 = vmax.f32 %v661, 0.0
    %v680 = vmax.f32 %v666, 0.0
    %v681 = vmax.f32 %v671, 0.0
    %s682 = scalar_lea.vmem [#allocation5], 128
    %v683 = vld [vmem:[%s682] sm:$0xff]
    %v684 = vld [vmem:[%s682 + $0x8] sm:$0xff]
    %v685 = vld [vmem:[%s682 + $0x10] sm:$0xff]
    %v686 = vld [vmem:[%s682 + $0x18] sm:$0xff]
    %v687 = vld [vmem:[%s682 + $0x20] sm:$0xff]
    %v688 = vld [vmem:[%s682 + $0x28] sm:$0xff]
    %v689 = vld [vmem:[%s682 + $0x30] sm:$0xff]
    %v690 = vld [vmem:[%s682 + $0x38] sm:$0xff]
    %691 = vrot.lane.b32.xlu0 %v674, 64
    %v692 = vpop.permute.xlu0 %691
    %693 = vrot.lane.b32.xlu0 %v675, 64
    %v694 = vpop.permute.xlu0 %693
    %695 = vrot.lane.b32.xlu0 %v676, 64
    %v696 = vpop.permute.xlu0 %695
    %697 = vrot.lane.b32.xlu0 %v677, 64
    %v698 = vpop.permute.xlu0 %697
    %699 = vrot.lane.b32.xlu0 %v678, 64
    %v700 = vpop.permute.xlu0 %699
    %701 = vrot.lane.b32.xlu0 %v679, 64
    %v702 = vpop.permute.xlu0 %701
    %703 = vrot.lane.b32.xlu0 %v680, 64
    %v704 = vpop.permute.xlu0 %703
    %705 = vrot.lane.b32.xlu0 %v681, 64
    %v706 = vpop.permute.xlu0 %705
    %v708 = vsel %vm124, %v683, 0
    %v711 = vsel %vm124, %v684, 0
    %v714 = vsel %vm124, %v685, 0
    %v717 = vsel %vm124, %v686, 0
    %v720 = vsel %vm124, %v687, 0
    %v723 = vsel %vm124, %v688, 0
    %v726 = vsel %vm124, %v689, 0
    %v729 = vsel %vm124, %v690, 0
    %731 = vmatprep.subr.mxu0 0.0
    %732 = vmatpush1.msra.mxu0 0.0
    %733 = vmatprep.subr.mxu0 0.0
    %734 = vmatpush1.msra.mxu0 0.0
    %735 = vmatprep.subr.mxu0 0.0
    %736 = vmatpush1.msra.mxu0 0.0
    %737 = vmatprep.subr.mxu0 0.0
    %738 = vmatpush1.msra.mxu0 0.0
    %739 = vmatprep.subr.mxu0 0.0
    %740 = vmatpush1.msra.mxu0 0.0
    %741 = vmatprep.subr.mxu0 0.0
    %742 = vmatpush1.msra.mxu0 0.0
    %743 = vmatprep.subr.mxu0 0.0
    %744 = vmatpush1.msra.mxu0 0.0
    %745 = vmatprep.subr.mxu0 0.0
    %746 = vmatpush1.msra.mxu0 0.0
    %747 = vmatprep.subr.mxu0 0.0
    %748 = vmatpush1.msra.mxu0 %v681
    %749 = vmatprep.subr.mxu0 0.0
    %750 = vmatpush1.msra.mxu0 %v680
    %751 = vmatprep.subr.mxu0 0.0
    %752 = vmatpush1.msra.mxu0 %v679
    %753 = vmatprep.subr.mxu0 0.0
    %754 = vmatpush1.msra.mxu0 %v678
    %755 = vmatprep.subr.mxu0 0.0
    %756 = vmatpush1.msra.mxu0 %v677
    %757 = vmatprep.subr.mxu0 0.0
    %758 = vmatpush1.msra.mxu0 %v676
    %759 = vmatprep.subr.mxu0 0.0
    %760 = vmatpush1.msra.mxu0 %v675
    %761 = vmatprep.subr.mxu0 0.0
    %762 = vmatpush1.msra.mxu0 %v674
    %763 = vmatprep.subr.mxu0 0.0
    %764 = vmatpush2.msra.mxu0 0.0
    %765 = vmatprep.subr.mxu0 0.0
    %766 = vmatpush2.msra.mxu0 0.0
    %767 = vmatprep.subr.mxu0 0.0
    %768 = vmatpush2.msra.mxu0 0.0
    %769 = vmatprep.subr.mxu0 0.0
    %770 = vmatpush2.msra.mxu0 0.0
    %771 = vmatprep.subr.mxu0 0.0
    %772 = vmatpush2.msra.mxu0 0.0
    %773 = vmatprep.subr.mxu0 0.0
    %774 = vmatpush2.msra.mxu0 0.0
    %775 = vmatprep.subr.mxu0 0.0
    %776 = vmatpush2.msra.mxu0 0.0
    %777 = vmatprep.subr.mxu0 0.0
    %778 = vmatpush2.msra.mxu0 0.0
    %779 = vmatprep.subr.mxu0 0.0
    %780 = vmatpush2.msra.mxu0 0.0
    %781 = vmatprep.subr.mxu0 0.0
    %782 = vmatpush2.msra.mxu0 0.0
    %783 = vmatprep.subr.mxu0 0.0
    %784 = vmatpush2.msra.mxu0 0.0
    %785 = vmatprep.subr.mxu0 0.0
    %786 = vmatpush2.msra.mxu0 0.0
    %787 = vmatprep.subr.mxu0 0.0
    %788 = vmatpush2.msra.mxu0 0.0
    %789 = vmatprep.subr.mxu0 0.0
    %790 = vmatpush2.msra.mxu0 0.0
    %791 = vmatprep.subr.mxu0 0.0
    %792 = vmatpush2.msra.mxu0 0.0
    %793 = vmatprep.subr.mxu0 0.0
    %794 = vmatpush2.msra.mxu0 0.0
    %795 = vmatprep.mubr.f32.mxu0 0.0
    %796 = vmatmul.mubr.f32.gmra.mxu0 %v708
    %v797 = vpop.f32.mrf.mxu0
    %v798 = vadd.f32 %v692, %v797
    %v799 = vpop.f32.mrf.mxu0
    %800 = vmatprep.mubr.f32.mxu0 0.0
    %801 = vmatmul.mubr.f32.gmra.mxu0 %v711
    %v802 = vpop.f32.mrf.mxu0
    %v803 = vadd.f32 %v694, %v802
    %v804 = vpop.f32.mrf.mxu0
    %805 = vmatprep.mubr.f32.mxu0 0.0
    %806 = vmatmul.mubr.f32.gmra.mxu0 %v714
    %v807 = vpop.f32.mrf.mxu0
    %v808 = vadd.f32 %v696, %v807
    %v809 = vpop.f32.mrf.mxu0
    %810 = vmatprep.mubr.f32.mxu0 0.0
    %811 = vmatmul.mubr.f32.gmra.mxu0 %v717
    %v812 = vpop.f32.mrf.mxu0
    %v813 = vadd.f32 %v698, %v812
    %v814 = vpop.f32.mrf.mxu0
    %815 = vmatprep.mubr.f32.mxu0 0.0
    %816 = vmatmul.mubr.f32.gmra.mxu0 %v720
    %v817 = vpop.f32.mrf.mxu0
    %v818 = vadd.f32 %v700, %v817
    %v819 = vpop.f32.mrf.mxu0
    %820 = vmatprep.mubr.f32.mxu0 0.0
    %821 = vmatmul.mubr.f32.gmra.mxu0 %v723
    %v822 = vpop.f32.mrf.mxu0
    %v823 = vadd.f32 %v702, %v822
    %v824 = vpop.f32.mrf.mxu0
    %825 = vmatprep.mubr.f32.mxu0 0.0
    %826 = vmatmul.mubr.f32.gmra.mxu0 %v726
    %v827 = vpop.f32.mrf.mxu0
    %v828 = vadd.f32 %v704, %v827
    %v829 = vpop.f32.mrf.mxu0
    %830 = vmatprep.mubr.f32.mxu0 0.0
    %831 = vmatmul.mubr.f32.gmra.mxu0 %v729
    %v832 = vpop.f32.mrf.mxu0
    %v833 = vadd.f32 %v706, %v832
    %v834 = vpop.f32.mrf.mxu0
    %835 = vdwg.mxu0
    %s836 = scalar_lea.vmem [#allocation7], 256
    %v837 = vld [vmem:[%s836] sm:$0xff]
    %v838 = vld [vmem:[%s836 + $0x8] sm:$0xff]
    %v839 = vld [vmem:[%s836 + $0x10] sm:$0xff]
    %v840 = vld [vmem:[%s836 + $0x18] sm:$0xff]
    %v841 = vld [vmem:[%s836 + $0x20] sm:$0xff]
    %v842 = vld [vmem:[%s836 + $0x28] sm:$0xff]
    %v843 = vld [vmem:[%s836 + $0x30] sm:$0xff]
    %v844 = vld [vmem:[%s836 + $0x38] sm:$0xff]
    %v845 = vld [vmem:[%s836 + $0x40] sm:$0xff]
    %v846 = vld [vmem:[%s836 + $0x48] sm:$0xff]
    %v847 = vld [vmem:[%s836 + $0x50] sm:$0xff]
    %v848 = vld [vmem:[%s836 + $0x58] sm:$0xff]
    %v849 = vld [vmem:[%s836 + $0x60] sm:$0xff]
    %v850 = vld [vmem:[%s836 + $0x68] sm:$0xff]
    %v851 = vld [vmem:[%s836 + $0x70] sm:$0xff]
    %v852 = vld [vmem:[%s836 + $0x78] sm:$0xff]
    %s853 = scalar_lea.vmem %s4, 2
    %v854 = vld [vmem:[%s853] sm:$0x1]
    %v856 = vlaneseq
    %v857 = vshrl.u32 %v856, 7
    %v858 = vsub.s32 0, %v857
    %v859 = vrot.slane %v854, %v858
    %861 = vmatprep.subr.mxu0 0.0
    %862 = vmatpush1.msra.mxu0 %v852
    %863 = vmatprep.subr.mxu0 0.0
    %864 = vmatpush1.msra.mxu0 %v851
    %865 = vmatprep.subr.mxu0 0.0
    %866 = vmatpush1.msra.mxu0 %v850
    %867 = vmatprep.subr.mxu0 0.0
    %868 = vmatpush1.msra.mxu0 %v849
    %869 = vmatprep.subr.mxu0 0.0
    %870 = vmatpush1.msra.mxu0 %v848
    %871 = vmatprep.subr.mxu0 0.0
    %872 = vmatpush1.msra.mxu0 %v847
    %873 = vmatprep.subr.mxu0 0.0
    %874 = vmatpush1.msra.mxu0 %v846
    %875 = vmatprep.subr.mxu0 0.0
    %876 = vmatpush1.msra.mxu0 %v845
    %877 = vmatprep.subr.mxu0 0.0
    %878 = vmatpush1.msra.mxu0 %v844
    %879 = vmatprep.subr.mxu0 0.0
    %880 = vmatpush1.msra.mxu0 %v843
    %881 = vmatprep.subr.mxu0 0.0
    %882 = vmatpush1.msra.mxu0 %v842
    %883 = vmatprep.subr.mxu0 0.0
    %884 = vmatpush1.msra.mxu0 %v841
    %885 = vmatprep.subr.mxu0 0.0
    %886 = vmatpush1.msra.mxu0 %v840
    %887 = vmatprep.subr.mxu0 0.0
    %888 = vmatpush1.msra.mxu0 %v839
    %889 = vmatprep.subr.mxu0 0.0
    %890 = vmatpush1.msra.mxu0 %v838
    %891 = vmatprep.subr.mxu0 0.0
    %892 = vmatpush1.msra.mxu0 %v837
    %893 = vmatprep.subr.mxu0 0.0
    %894 = vmatpush2.msra.mxu0 0.0
    %895 = vmatprep.subr.mxu0 0.0
    %896 = vmatpush2.msra.mxu0 0.0
    %897 = vmatprep.subr.mxu0 0.0
    %898 = vmatpush2.msra.mxu0 0.0
    %899 = vmatprep.subr.mxu0 0.0
    %900 = vmatpush2.msra.mxu0 0.0
    %901 = vmatprep.subr.mxu0 0.0
    %902 = vmatpush2.msra.mxu0 0.0
    %903 = vmatprep.subr.mxu0 0.0
    %904 = vmatpush2.msra.mxu0 0.0
    %905 = vmatprep.subr.mxu0 0.0
    %906 = vmatpush2.msra.mxu0 0.0
    %907 = vmatprep.subr.mxu0 0.0
    %908 = vmatpush2.msra.mxu0 0.0
    %909 = vmatprep.subr.mxu0 0.0
    %910 = vmatpush2.msra.mxu0 0.0
    %911 = vmatprep.subr.mxu0 0.0
    %912 = vmatpush2.msra.mxu0 0.0
    %913 = vmatprep.subr.mxu0 0.0
    %914 = vmatpush2.msra.mxu0 0.0
    %915 = vmatprep.subr.mxu0 0.0
    %916 = vmatpush2.msra.mxu0 0.0
    %917 = vmatprep.subr.mxu0 0.0
    %918 = vmatpush2.msra.mxu0 0.0
    %919 = vmatprep.subr.mxu0 0.0
    %920 = vmatpush2.msra.mxu0 0.0
    %921 = vmatprep.subr.mxu0 0.0
    %922 = vmatpush2.msra.mxu0 0.0
    %923 = vmatprep.subr.mxu0 0.0
    %924 = vmatpush2.msra.mxu0 0.0
    %925 = vmatprep.mubr.f32.mxu0 0.0
    %926 = vmatmul.mubr.f32.gmra.mxu0 %v798
    %v927 = vpop.f32.mrf.mxu0
    %v928 = vadd.f32 %v859, %v927
    %v929 = vpop.f32.mrf.mxu0
    %930 = vmatprep.mubr.f32.mxu0 0.0
    %931 = vmatmul.mubr.f32.gmra.mxu0 %v803
    %v932 = vpop.f32.mrf.mxu0
    %v933 = vadd.f32 %v859, %v932
    %v934 = vpop.f32.mrf.mxu0
    %935 = vmatprep.mubr.f32.mxu0 0.0
    %936 = vmatmul.mubr.f32.gmra.mxu0 %v808
    %v937 = vpop.f32.mrf.mxu0
    %v938 = vadd.f32 %v859, %v937
    %v939 = vpop.f32.mrf.mxu0
    %940 = vmatprep.mubr.f32.mxu0 0.0
    %941 = vmatmul.mubr.f32.gmra.mxu0 %v813
    %v942 = vpop.f32.mrf.mxu0
    %v943 = vadd.f32 %v859, %v942
    %v944 = vpop.f32.mrf.mxu0
    %945 = vmatprep.mubr.f32.mxu0 0.0
    %946 = vmatmul.mubr.f32.gmra.mxu0 %v818
    %v947 = vpop.f32.mrf.mxu0
    %v948 = vadd.f32 %v859, %v947
    %v949 = vpop.f32.mrf.mxu0
    %950 = vmatprep.mubr.f32.mxu0 0.0
    %951 = vmatmul.mubr.f32.gmra.mxu0 %v823
    %v952 = vpop.f32.mrf.mxu0
    %v953 = vadd.f32 %v859, %v952
    %v954 = vpop.f32.mrf.mxu0
    %955 = vmatprep.mubr.f32.mxu0 0.0
    %956 = vmatmul.mubr.f32.gmra.mxu0 %v828
    %v957 = vpop.f32.mrf.mxu0
    %v958 = vadd.f32 %v859, %v957
    %v959 = vpop.f32.mrf.mxu0
    %960 = vmatprep.mubr.f32.mxu0 0.0
    %961 = vmatmul.mubr.f32.gmra.mxu0 %v833
    %v962 = vpop.f32.mrf.mxu0
    %v963 = vadd.f32 %v859, %v962
    %v964 = vpop.f32.mrf.mxu0
    %965 = vdwg.mxu0
    %v966 = vld [vmem:[#allocation10] sm:$0xff]
    %v967 = vld [vmem:[#allocation10 + $0x8] sm:$0xff]
    %v968 = vld [vmem:[#allocation10 + $0x10] sm:$0xff]
    %v969 = vld [vmem:[#allocation10 + $0x18] sm:$0xff]
    %v971 = vsel %vm124, %v966, 0
    %v974 = vsel %vm124, %v967, 0
    %v977 = vsel %vm124, %v968, 0
    %v980 = vsel %vm124, %v969, 0
    %982 = vmatprep.subr.mxu0 0.0
    %983 = vmatpush1.msra.mxu0 0.0
    %984 = vmatprep.subr.mxu0 0.0
    %985 = vmatpush1.msra.mxu0 0.0
    %986 = vmatprep.subr.mxu0 0.0
    %987 = vmatpush1.msra.mxu0 0.0
    %988 = vmatprep.subr.mxu0 0.0
    %989 = vmatpush1.msra.mxu0 0.0
    %990 = vmatprep.subr.mxu0 0.0
    %991 = vmatpush1.msra.mxu0 0.0
    %992 = vmatprep.subr.mxu0 0.0
    %993 = vmatpush1.msra.mxu0 0.0
    %994 = vmatprep.subr.mxu0 0.0
    %995 = vmatpush1.msra.mxu0 0.0
    %996 = vmatprep.subr.mxu0 0.0
    %997 = vmatpush1.msra.mxu0 0.0
    %998 = vmatprep.subr.mxu0 0.0
    %999 = vmatpush1.msra.mxu0 %v963
    %1000 = vmatprep.subr.mxu0 0.0
    %1001 = vmatpush1.msra.mxu0 %v958
    %1002 = vmatprep.subr.mxu0 0.0
    %1003 = vmatpush1.msra.mxu0 %v953
    %1004 = vmatprep.subr.mxu0 0.0
    %1005 = vmatpush1.msra.mxu0 %v948
    %1006 = vmatprep.subr.mxu0 0.0
    %1007 = vmatpush1.msra.mxu0 %v943
    %1008 = vmatprep.subr.mxu0 0.0
    %1009 = vmatpush1.msra.mxu0 %v938
    %1010 = vmatprep.subr.mxu0 0.0
    %1011 = vmatpush1.msra.mxu0 %v933
    %1012 = vmatprep.subr.mxu0 0.0
    %1013 = vmatpush1.msra.mxu0 %v928
    %1014 = vmatprep.subr.mxu0 0.0
    %1015 = vmatpush2.msra.mxu0 0.0
    %1016 = vmatprep.subr.mxu0 0.0
    %1017 = vmatpush2.msra.mxu0 0.0
    %1018 = vmatprep.subr.mxu0 0.0
    %1019 = vmatpush2.msra.mxu0 0.0
    %1020 = vmatprep.subr.mxu0 0.0
    %1021 = vmatpush2.msra.mxu0 0.0
    %1022 = vmatprep.subr.mxu0 0.0
    %1023 = vmatpush2.msra.mxu0 0.0
    %1024 = vmatprep.subr.mxu0 0.0
    %1025 = vmatpush2.msra.mxu0 0.0
    %1026 = vmatprep.subr.mxu0 0.0
    %1027 = vmatpush2.msra.mxu0 0.0
    %1028 = vmatprep.subr.mxu0 0.0
    %1029 = vmatpush2.msra.mxu0 0.0
    %1030 = vmatprep.subr.mxu0 0.0
    %1031 = vmatpush2.msra.mxu0 0.0
    %1032 = vmatprep.subr.mxu0 0.0
    %1033 = vmatpush2.msra.mxu0 0.0
    %1034 = vmatprep.subr.mxu0 0.0
    %1035 = vmatpush2.msra.mxu0 0.0
    %1036 = vmatprep.subr.mxu0 0.0
    %1037 = vmatpush2.msra.mxu0 0.0
    %1038 = vmatprep.subr.mxu0 0.0
    %1039 = vmatpush2.msra.mxu0 0.0
    %1040 = vmatprep.subr.mxu0 0.0
    %1041 = vmatpush2.msra.mxu0 0.0
    %1042 = vmatprep.subr.mxu0 0.0
    %1043 = vmatpush2.msra.mxu0 0.0
    %1044 = vmatprep.subr.mxu0 0.0
    %1045 = vmatpush2.msra.mxu0 0.0
    %1046 = vmatprep.mubr.f32.mxu0 0.0
    %1047 = vmatmul.mubr.f32.gmra.mxu0 %v971
    %v1048 = vpop.f32.mrf.mxu0
    %v1049 = vadd.f32 0.0, %v1048
    %v1050 = vpop.f32.mrf.mxu0
    %1051 = vmatprep.mubr.f32.mxu0 0.0
    %1052 = vmatmul.mubr.f32.gmra.mxu0 %v974
    %v1053 = vpop.f32.mrf.mxu0
    %v1054 = vadd.f32 0.0, %v1053
    %v1055 = vpop.f32.mrf.mxu0
    %1056 = vmatprep.mubr.f32.mxu0 0.0
    %1057 = vmatmul.mubr.f32.gmra.mxu0 %v977
    %v1058 = vpop.f32.mrf.mxu0
    %v1059 = vadd.f32 0.0, %v1058
    %v1060 = vpop.f32.mrf.mxu0
    %1061 = vmatprep.mubr.f32.mxu0 0.0
    %1062 = vmatmul.mubr.f32.gmra.mxu0 %v980
    %v1063 = vpop.f32.mrf.mxu0
    %v1064 = vadd.f32 0.0, %v1063
    %v1065 = vpop.f32.mrf.mxu0
    %1066 = vdwg.mxu0
    %s1067 = scalar_lea.vmem [#allocation10], 32
    %v1068 = vld [vmem:[%s1067] sm:$0xff]
    %v1069 = vld [vmem:[%s1067 + $0x8] sm:$0xff]
    %v1070 = vld [vmem:[%s1067 + $0x10] sm:$0xff]
    %v1071 = vld [vmem:[%s1067 + $0x18] sm:$0xff]
    %v1073 = vsel %vm124, %v1068, 0
    %v1076 = vsel %vm124, %v1069, 0
    %v1079 = vsel %vm124, %v1070, 0
    %v1082 = vsel %vm124, %v1071, 0
    %1084 = vmatprep.subr.mxu0 0.0
    %1085 = vmatpush1.msra.mxu0 0.0
    %1086 = vmatprep.subr.mxu0 0.0
    %1087 = vmatpush1.msra.mxu0 0.0
    %1088 = vmatprep.subr.mxu0 0.0
    %1089 = vmatpush1.msra.mxu0 0.0
    %1090 = vmatprep.subr.mxu0 0.0
    %1091 = vmatpush1.msra.mxu0 0.0
    %1092 = vmatprep.subr.mxu0 0.0
    %1093 = vmatpush1.msra.mxu0 0.0
    %1094 = vmatprep.subr.mxu0 0.0
    %1095 = vmatpush1.msra.mxu0 0.0
    %1096 = vmatprep.subr.mxu0 0.0
    %1097 = vmatpush1.msra.mxu0 0.0
    %1098 = vmatprep.subr.mxu0 0.0
    %1099 = vmatpush1.msra.mxu0 0.0
    %1100 = vmatprep.subr.mxu0 0.0
    %1101 = vmatpush1.msra.mxu0 %v963
    %1102 = vmatprep.subr.mxu0 0.0
    %1103 = vmatpush1.msra.mxu0 %v958
    %1104 = vmatprep.subr.mxu0 0.0
    %1105 = vmatpush1.msra.mxu0 %v953
    %1106 = vmatprep.subr.mxu0 0.0
    %1107 = vmatpush1.msra.mxu0 %v948
    %1108 = vmatprep.subr.mxu0 0.0
    %1109 = vmatpush1.msra.mxu0 %v943
    %1110 = vmatprep.subr.mxu0 0.0
    %1111 = vmatpush1.msra.mxu0 %v938
    %1112 = vmatprep.subr.mxu0 0.0
    %1113 = vmatpush1.msra.mxu0 %v933
    %1114 = vmatprep.subr.mxu0 0.0
    %1115 = vmatpush1.msra.mxu0 %v928
    %1116 = vmatprep.subr.mxu0 0.0
    %1117 = vmatpush2.msra.mxu0 0.0
    %1118 = vmatprep.subr.mxu0 0.0
    %1119 = vmatpush2.msra.mxu0 0.0
    %1120 = vmatprep.subr.mxu0 0.0
    %1121 = vmatpush2.msra.mxu0 0.0
    %1122 = vmatprep.subr.mxu0 0.0
    %1123 = vmatpush2.msra.mxu0 0.0
    %1124 = vmatprep.subr.mxu0 0.0
    %1125 = vmatpush2.msra.mxu0 0.0
    %1126 = vmatprep.subr.mxu0 0.0
    %1127 = vmatpush2.msra.mxu0 0.0
    %1128 = vmatprep.subr.mxu0 0.0
    %1129 = vmatpush2.msra.mxu0 0.0
    %1130 = vmatprep.subr.mxu0 0.0
    %1131 = vmatpush2.msra.mxu0 0.0
    %1132 = vmatprep.subr.mxu0 0.0
    %1133 = vmatpush2.msra.mxu0 0.0
    %1134 = vmatprep.subr.mxu0 0.0
    %1135 = vmatpush2.msra.mxu0 0.0
    %1136 = vmatprep.subr.mxu0 0.0
    %1137 = vmatpush2.msra.mxu0 0.0
    %1138 = vmatprep.subr.mxu0 0.0
    %1139 = vmatpush2.msra.mxu0 0.0
    %1140 = vmatprep.subr.mxu0 0.0
    %1141 = vmatpush2.msra.mxu0 0.0
    %1142 = vmatprep.subr.mxu0 0.0
    %1143 = vmatpush2.msra.mxu0 0.0
    %1144 = vmatprep.subr.mxu0 0.0
    %1145 = vmatpush2.msra.mxu0 0.0
    %1146 = vmatprep.subr.mxu0 0.0
    %1147 = vmatpush2.msra.mxu0 0.0
    %1148 = vmatprep.mubr.f32.mxu0 0.0
    %1149 = vmatmul.mubr.f32.gmra.mxu0 %v1073
    %v1150 = vpop.f32.mrf.mxu0
    %v1151 = vadd.f32 0.0, %v1150
    %v1152 = vpop.f32.mrf.mxu0
    %1153 = vmatprep.mubr.f32.mxu0 0.0
    %1154 = vmatmul.mubr.f32.gmra.mxu0 %v1076
    %v1155 = vpop.f32.mrf.mxu0
    %v1156 = vadd.f32 0.0, %v1155
    %v1157 = vpop.f32.mrf.mxu0
    %1158 = vmatprep.mubr.f32.mxu0 0.0
    %1159 = vmatmul.mubr.f32.gmra.mxu0 %v1079
    %v1160 = vpop.f32.mrf.mxu0
    %v1161 = vadd.f32 0.0, %v1160
    %v1162 = vpop.f32.mrf.mxu0
    %1163 = vmatprep.mubr.f32.mxu0 0.0
    %1164 = vmatmul.mubr.f32.gmra.mxu0 %v1082
    %v1165 = vpop.f32.mrf.mxu0
    %v1166 = vadd.f32 0.0, %v1165
    %v1167 = vpop.f32.mrf.mxu0
    %1168 = vdwg.mxu0
    %v1169 = vmul.f32 %v1049, %v1151
    %v1170 = vmul.f32 %v1054, %v1156
    %v1171 = vmul.f32 %v1059, %v1161
    %v1172 = vmul.f32 %v1064, %v1166
    %v1173 = vld [vmem:[#allocation8] sm:$0xff]
    %v1174 = vld [vmem:[#allocation8 + $0x8] sm:$0xff]
    %v1175 = vld [vmem:[#allocation8 + $0x10] sm:$0xff]
    %v1176 = vld [vmem:[#allocation8 + $0x18] sm:$0xff]
    %v1177 = vld [vmem:[#allocation8 + $0x20] sm:$0xff]
    %v1178 = vld [vmem:[#allocation8 + $0x28] sm:$0xff]
    %v1179 = vld [vmem:[#allocation8 + $0x30] sm:$0xff]
    %v1180 = vld [vmem:[#allocation8 + $0x38] sm:$0xff]
    %v1181 = vld [vmem:[#allocation8 + $0x40] sm:$0xff]
    %v1182 = vld [vmem:[#allocation8 + $0x48] sm:$0xff]
    %v1183 = vld [vmem:[#allocation8 + $0x50] sm:$0xff]
    %v1184 = vld [vmem:[#allocation8 + $0x58] sm:$0xff]
    %v1185 = vld [vmem:[#allocation8 + $0x60] sm:$0xff]
    %v1186 = vld [vmem:[#allocation8 + $0x68] sm:$0xff]
    %v1187 = vld [vmem:[#allocation8 + $0x70] sm:$0xff]
    %v1188 = vld [vmem:[#allocation8 + $0x78] sm:$0xff]
    %s1189 = scalar_lea.vmem %s4, 3
    %v1190 = vld [vmem:[%s1189] sm:$0x1]
    %v1192 = vlaneseq
    %v1193 = vshrl.u32 %v1192, 7
    %v1194 = vsub.s32 0, %v1193
    %v1195 = vrot.slane %v1190, %v1194
    %1197 = vmatprep.subr.mxu0 0.0
    %1198 = vmatpush1.msra.mxu0 %v1188
    %1199 = vmatprep.subr.mxu0 0.0
    %1200 = vmatpush1.msra.mxu0 %v1187
    %1201 = vmatprep.subr.mxu0 0.0
    %1202 = vmatpush1.msra.mxu0 %v1186
    %1203 = vmatprep.subr.mxu0 0.0
    %1204 = vmatpush1.msra.mxu0 %v1185
    %1205 = vmatprep.subr.mxu0 0.0
    %1206 = vmatpush1.msra.mxu0 %v1184
    %1207 = vmatprep.subr.mxu0 0.0
    %1208 = vmatpush1.msra.mxu0 %v1183
    %1209 = vmatprep.subr.mxu0 0.0
    %1210 = vmatpush1.msra.mxu0 %v1182
    %1211 = vmatprep.subr.mxu0 0.0
    %1212 = vmatpush1.msra.mxu0 %v1181
    %1213 = vmatprep.subr.mxu0 0.0
    %1214 = vmatpush1.msra.mxu0 %v1180
    %1215 = vmatprep.subr.mxu0 0.0
    %1216 = vmatpush1.msra.mxu0 %v1179
    %1217 = vmatprep.subr.mxu0 0.0
    %1218 = vmatpush1.msra.mxu0 %v1178
    %1219 = vmatprep.subr.mxu0 0.0
    %1220 = vmatpush1.msra.mxu0 %v1177
    %1221 = vmatprep.subr.mxu0 0.0
    %1222 = vmatpush1.msra.mxu0 %v1176
    %1223 = vmatprep.subr.mxu0 0.0
    %1224 = vmatpush1.msra.mxu0 %v1175
    %1225 = vmatprep.subr.mxu0 0.0
    %1226 = vmatpush1.msra.mxu0 %v1174
    %1227 = vmatprep.subr.mxu0 0.0
    %1228 = vmatpush1.msra.mxu0 %v1173
    %1229 = vmatprep.subr.mxu0 0.0
    %1230 = vmatpush2.msra.mxu0 0.0
    %1231 = vmatprep.subr.mxu0 0.0
    %1232 = vmatpush2.msra.mxu0 0.0
    %1233 = vmatprep.subr.mxu0 0.0
    %1234 = vmatpush2.msra.mxu0 0.0
    %1235 = vmatprep.subr.mxu0 0.0
    %1236 = vmatpush2.msra.mxu0 0.0
    %1237 = vmatprep.subr.mxu0 0.0
    %1238 = vmatpush2.msra.mxu0 0.0
    %1239 = vmatprep.subr.mxu0 0.0
    %1240 = vmatpush2.msra.mxu0 0.0
    %1241 = vmatprep.subr.mxu0 0.0
    %1242 = vmatpush2.msra.mxu0 0.0
    %1243 = vmatprep.subr.mxu0 0.0
    %1244 = vmatpush2.msra.mxu0 0.0
    %1245 = vmatprep.subr.mxu0 0.0
    %1246 = vmatpush2.msra.mxu0 0.0
    %1247 = vmatprep.subr.mxu0 0.0
    %1248 = vmatpush2.msra.mxu0 0.0
    %1249 = vmatprep.subr.mxu0 0.0
    %1250 = vmatpush2.msra.mxu0 0.0
    %1251 = vmatprep.subr.mxu0 0.0
    %1252 = vmatpush2.msra.mxu0 0.0
    %1253 = vmatprep.subr.mxu0 0.0
    %1254 = vmatpush2.msra.mxu0 0.0
    %1255 = vmatprep.subr.mxu0 0.0
    %1256 = vmatpush2.msra.mxu0 0.0
    %1257 = vmatprep.subr.mxu0 0.0
    %1258 = vmatpush2.msra.mxu0 0.0
    %1259 = vmatprep.subr.mxu0 0.0
    %1260 = vmatpush2.msra.mxu0 0.0
    %1261 = vmatprep.mubr.f32.mxu0 0.0
    %1262 = vmatmul.mubr.f32.gmra.mxu0 %v1169
    %v1263 = vpop.f32.mrf.mxu0
    %v1264 = vadd.f32 %v1195, %v1263
    %v1265 = vpop.f32.mrf.mxu0
    %1266 = vmatprep.mubr.f32.mxu0 0.0
    %1267 = vmatmul.mubr.f32.gmra.mxu0 %v1170
    %v1268 = vpop.f32.mrf.mxu0
    %v1269 = vadd.f32 %v1195, %v1268
    %v1270 = vpop.f32.mrf.mxu0
    %1271 = vmatprep.mubr.f32.mxu0 0.0
    %1272 = vmatmul.mubr.f32.gmra.mxu0 %v1171
    %v1273 = vpop.f32.mrf.mxu0
    %v1274 = vadd.f32 %v1195, %v1273
    %v1275 = vpop.f32.mrf.mxu0
    %1276 = vmatprep.mubr.f32.mxu0 0.0
    %1277 = vmatmul.mubr.f32.gmra.mxu0 %v1172
    %v1278 = vpop.f32.mrf.mxu0
    %v1279 = vadd.f32 %v1195, %v1278
    %v1280 = vpop.f32.mrf.mxu0
    %1281 = vdwg.mxu0
    %v1282 = vmax.f32 %v1264, 0.0
    %v1283 = vmax.f32 %v1269, 0.0
    %v1284 = vmax.f32 %v1274, 0.0
    %v1285 = vmax.f32 %v1279, 0.0
    %s1286 = scalar_lea.vmem [#allocation8], 128
    %v1287 = vld [vmem:[%s1286] sm:$0xff]
    %v1288 = vld [vmem:[%s1286 + $0x8] sm:$0xff]
    %v1289 = vld [vmem:[%s1286 + $0x10] sm:$0xff]
    %v1290 = vld [vmem:[%s1286 + $0x18] sm:$0xff]
    %v1291 = vld [vmem:[%s1286 + $0x20] sm:$0xff]
    %v1292 = vld [vmem:[%s1286 + $0x28] sm:$0xff]
    %v1293 = vld [vmem:[%s1286 + $0x30] sm:$0xff]
    %v1294 = vld [vmem:[%s1286 + $0x38] sm:$0xff]
    %v1295 = vld [vmem:[%s1286 + $0x40] sm:$0xff]
    %v1296 = vld [vmem:[%s1286 + $0x48] sm:$0xff]
    %v1297 = vld [vmem:[%s1286 + $0x50] sm:$0xff]
    %v1298 = vld [vmem:[%s1286 + $0x58] sm:$0xff]
    %v1299 = vld [vmem:[%s1286 + $0x60] sm:$0xff]
    %v1300 = vld [vmem:[%s1286 + $0x68] sm:$0xff]
    %v1301 = vld [vmem:[%s1286 + $0x70] sm:$0xff]
    %v1302 = vld [vmem:[%s1286 + $0x78] sm:$0xff]
    %s1303 = scalar_lea.vmem %s4, 4
    %v1304 = vld [vmem:[%s1303] sm:$0x1]
    %v1306 = vlaneseq
    %v1307 = vshrl.u32 %v1306, 7
    %v1308 = vsub.s32 0, %v1307
    %v1309 = vrot.slane %v1304, %v1308
    %1311 = vmatprep.subr.mxu0 0.0
    %1312 = vmatpush1.msra.mxu0 %v1302
    %1313 = vmatprep.subr.mxu0 0.0
    %1314 = vmatpush1.msra.mxu0 %v1301
    %1315 = vmatprep.subr.mxu0 0.0
    %1316 = vmatpush1.msra.mxu0 %v1300
    %1317 = vmatprep.subr.mxu0 0.0
    %1318 = vmatpush1.msra.mxu0 %v1299
    %1319 = vmatprep.subr.mxu0 0.0
    %1320 = vmatpush1.msra.mxu0 %v1298
    %1321 = vmatprep.subr.mxu0 0.0
    %1322 = vmatpush1.msra.mxu0 %v1297
    %1323 = vmatprep.subr.mxu0 0.0
    %1324 = vmatpush1.msra.mxu0 %v1296
    %1325 = vmatprep.subr.mxu0 0.0
    %1326 = vmatpush1.msra.mxu0 %v1295
    %1327 = vmatprep.subr.mxu0 0.0
    %1328 = vmatpush1.msra.mxu0 %v1294
    %1329 = vmatprep.subr.mxu0 0.0
    %1330 = vmatpush1.msra.mxu0 %v1293
    %1331 = vmatprep.subr.mxu0 0.0
    %1332 = vmatpush1.msra.mxu0 %v1292
    %1333 = vmatprep.subr.mxu0 0.0
    %1334 = vmatpush1.msra.mxu0 %v1291
    %1335 = vmatprep.subr.mxu0 0.0
    %1336 = vmatpush1.msra.mxu0 %v1290
    %1337 = vmatprep.subr.mxu0 0.0
    %1338 = vmatpush1.msra.mxu0 %v1289
    %1339 = vmatprep.subr.mxu0 0.0
    %1340 = vmatpush1.msra.mxu0 %v1288
    %1341 = vmatprep.subr.mxu0 0.0
    %1342 = vmatpush1.msra.mxu0 %v1287
    %1343 = vmatprep.subr.mxu0 0.0
    %1344 = vmatpush2.msra.mxu0 0.0
    %1345 = vmatprep.subr.mxu0 0.0
    %1346 = vmatpush2.msra.mxu0 0.0
    %1347 = vmatprep.subr.mxu0 0.0
    %1348 = vmatpush2.msra.mxu0 0.0
    %1349 = vmatprep.subr.mxu0 0.0
    %1350 = vmatpush2.msra.mxu0 0.0
    %1351 = vmatprep.subr.mxu0 0.0
    %1352 = vmatpush2.msra.mxu0 0.0
    %1353 = vmatprep.subr.mxu0 0.0
    %1354 = vmatpush2.msra.mxu0 0.0
    %1355 = vmatprep.subr.mxu0 0.0
    %1356 = vmatpush2.msra.mxu0 0.0
    %1357 = vmatprep.subr.mxu0 0.0
    %1358 = vmatpush2.msra.mxu0 0.0
    %1359 = vmatprep.subr.mxu0 0.0
    %1360 = vmatpush2.msra.mxu0 0.0
    %1361 = vmatprep.subr.mxu0 0.0
    %1362 = vmatpush2.msra.mxu0 0.0
    %1363 = vmatprep.subr.mxu0 0.0
    %1364 = vmatpush2.msra.mxu0 0.0
    %1365 = vmatprep.subr.mxu0 0.0
    %1366 = vmatpush2.msra.mxu0 0.0
    %1367 = vmatprep.subr.mxu0 0.0
    %1368 = vmatpush2.msra.mxu0 0.0
    %1369 = vmatprep.subr.mxu0 0.0
    %1370 = vmatpush2.msra.mxu0 0.0
    %1371 = vmatprep.subr.mxu0 0.0
    %1372 = vmatpush2.msra.mxu0 0.0
    %1373 = vmatprep.subr.mxu0 0.0
    %1374 = vmatpush2.msra.mxu0 0.0
    %1375 = vmatprep.mubr.f32.mxu0 0.0
    %1376 = vmatmul.mubr.f32.gmra.mxu0 %v1282
    %v1377 = vpop.f32.mrf.mxu0
    %v1378 = vadd.f32 %v1309, %v1377
    %v1379 = vpop.f32.mrf.mxu0
    %1380 = vmatprep.mubr.f32.mxu0 0.0
    %1381 = vmatmul.mubr.f32.gmra.mxu0 %v1283
    %v1382 = vpop.f32.mrf.mxu0
    %v1383 = vadd.f32 %v1309, %v1382
    %v1384 = vpop.f32.mrf.mxu0
    %1385 = vmatprep.mubr.f32.mxu0 0.0
    %1386 = vmatmul.mubr.f32.gmra.mxu0 %v1284
    %v1387 = vpop.f32.mrf.mxu0
    %v1388 = vadd.f32 %v1309, %v1387
    %v1389 = vpop.f32.mrf.mxu0
    %1390 = vmatprep.mubr.f32.mxu0 0.0
    %1391 = vmatmul.mubr.f32.gmra.mxu0 %v1285
    %v1392 = vpop.f32.mrf.mxu0
    %v1393 = vadd.f32 %v1309, %v1392
    %v1394 = vpop.f32.mrf.mxu0
    %1395 = vdwg.mxu0
    %v1396 = vmax.f32 %v1378, 0.0
    %v1397 = vmax.f32 %v1383, 0.0
    %v1398 = vmax.f32 %v1388, 0.0
    %v1399 = vmax.f32 %v1393, 0.0
    %s1400 = scalar_lea.vmem [#allocation8], 256
    %v1401 = vld [vmem:[%s1400] sm:$0xff]
    %v1402 = vld [vmem:[%s1400 + $0x8] sm:$0xff]
    %v1403 = vld [vmem:[%s1400 + $0x10] sm:$0xff]
    %v1404 = vld [vmem:[%s1400 + $0x18] sm:$0xff]
    %v1405 = vld [vmem:[%s1400 + $0x20] sm:$0xff]
    %v1406 = vld [vmem:[%s1400 + $0x28] sm:$0xff]
    %v1407 = vld [vmem:[%s1400 + $0x30] sm:$0xff]
    %v1408 = vld [vmem:[%s1400 + $0x38] sm:$0xff]
    %v1409 = vld [vmem:[%s1400 + $0x40] sm:$0xff]
    %v1410 = vld [vmem:[%s1400 + $0x48] sm:$0xff]
    %v1411 = vld [vmem:[%s1400 + $0x50] sm:$0xff]
    %v1412 = vld [vmem:[%s1400 + $0x58] sm:$0xff]
    %v1413 = vld [vmem:[%s1400 + $0x60] sm:$0xff]
    %v1414 = vld [vmem:[%s1400 + $0x68] sm:$0xff]
    %v1415 = vld [vmem:[%s1400 + $0x70] sm:$0xff]
    %v1416 = vld [vmem:[%s1400 + $0x78] sm:$0xff]
    %s1417 = scalar_lea.vmem %s4, 5
    %v1418 = vld [vmem:[%s1417] sm:$0x1]
    %v1420 = vlaneseq
    %v1421 = vshrl.u32 %v1420, 7
    %v1422 = vsub.s32 0, %v1421
    %v1423 = vrot.slane %v1418, %v1422
    %1425 = vmatprep.subr.mxu0 0.0
    %1426 = vmatpush1.msra.mxu0 %v1416
    %1427 = vmatprep.subr.mxu0 0.0
    %1428 = vmatpush1.msra.mxu0 %v1415
    %1429 = vmatprep.subr.mxu0 0.0
    %1430 = vmatpush1.msra.mxu0 %v1414
    %1431 = vmatprep.subr.mxu0 0.0
    %1432 = vmatpush1.msra.mxu0 %v1413
    %1433 = vmatprep.subr.mxu0 0.0
    %1434 = vmatpush1.msra.mxu0 %v1412
    %1435 = vmatprep.subr.mxu0 0.0
    %1436 = vmatpush1.msra.mxu0 %v1411
    %1437 = vmatprep.subr.mxu0 0.0
    %1438 = vmatpush1.msra.mxu0 %v1410
    %1439 = vmatprep.subr.mxu0 0.0
    %1440 = vmatpush1.msra.mxu0 %v1409
    %1441 = vmatprep.subr.mxu0 0.0
    %1442 = vmatpush1.msra.mxu0 %v1408
    %1443 = vmatprep.subr.mxu0 0.0
    %1444 = vmatpush1.msra.mxu0 %v1407
    %1445 = vmatprep.subr.mxu0 0.0
    %1446 = vmatpush1.msra.mxu0 %v1406
    %1447 = vmatprep.subr.mxu0 0.0
    %1448 = vmatpush1.msra.mxu0 %v1405
    %1449 = vmatprep.subr.mxu0 0.0
    %1450 = vmatpush1.msra.mxu0 %v1404
    %1451 = vmatprep.subr.mxu0 0.0
    %1452 = vmatpush1.msra.mxu0 %v1403
    %1453 = vmatprep.subr.mxu0 0.0
    %1454 = vmatpush1.msra.mxu0 %v1402
    %1455 = vmatprep.subr.mxu0 0.0
    %1456 = vmatpush1.msra.mxu0 %v1401
    %1457 = vmatprep.subr.mxu0 0.0
    %1458 = vmatpush2.msra.mxu0 0.0
    %1459 = vmatprep.subr.mxu0 0.0
    %1460 = vmatpush2.msra.mxu0 0.0
    %1461 = vmatprep.subr.mxu0 0.0
    %1462 = vmatpush2.msra.mxu0 0.0
    %1463 = vmatprep.subr.mxu0 0.0
    %1464 = vmatpush2.msra.mxu0 0.0
    %1465 = vmatprep.subr.mxu0 0.0
    %1466 = vmatpush2.msra.mxu0 0.0
    %1467 = vmatprep.subr.mxu0 0.0
    %1468 = vmatpush2.msra.mxu0 0.0
    %1469 = vmatprep.subr.mxu0 0.0
    %1470 = vmatpush2.msra.mxu0 0.0
    %1471 = vmatprep.subr.mxu0 0.0
    %1472 = vmatpush2.msra.mxu0 0.0
    %1473 = vmatprep.subr.mxu0 0.0
    %1474 = vmatpush2.msra.mxu0 0.0
    %1475 = vmatprep.subr.mxu0 0.0
    %1476 = vmatpush2.msra.mxu0 0.0
    %1477 = vmatprep.subr.mxu0 0.0
    %1478 = vmatpush2.msra.mxu0 0.0
    %1479 = vmatprep.subr.mxu0 0.0
    %1480 = vmatpush2.msra.mxu0 0.0
    %1481 = vmatprep.subr.mxu0 0.0
    %1482 = vmatpush2.msra.mxu0 0.0
    %1483 = vmatprep.subr.mxu0 0.0
    %1484 = vmatpush2.msra.mxu0 0.0
    %1485 = vmatprep.subr.mxu0 0.0
    %1486 = vmatpush2.msra.mxu0 0.0
    %1487 = vmatprep.subr.mxu0 0.0
    %1488 = vmatpush2.msra.mxu0 0.0
    %1489 = vmatprep.mubr.f32.mxu0 0.0
    %1490 = vmatmul.mubr.f32.gmra.mxu0 %v1396
    %v1491 = vpop.f32.mrf.mxu0
    %v1492 = vadd.f32 %v1423, %v1491
    %v1493 = vpop.f32.mrf.mxu0
    %1494 = vmatprep.mubr.f32.mxu0 0.0
    %1495 = vmatmul.mubr.f32.gmra.mxu0 %v1397
    %v1496 = vpop.f32.mrf.mxu0
    %v1497 = vadd.f32 %v1423, %v1496
    %v1498 = vpop.f32.mrf.mxu0
    %1499 = vmatprep.mubr.f32.mxu0 0.0
    %1500 = vmatmul.mubr.f32.gmra.mxu0 %v1398
    %v1501 = vpop.f32.mrf.mxu0
    %v1502 = vadd.f32 %v1423, %v1501
    %v1503 = vpop.f32.mrf.mxu0
    %1504 = vmatprep.mubr.f32.mxu0 0.0
    %1505 = vmatmul.mubr.f32.gmra.mxu0 %v1399
    %v1506 = vpop.f32.mrf.mxu0
    %v1507 = vadd.f32 %v1423, %v1506
    %v1508 = vpop.f32.mrf.mxu0
    %1509 = vdwg.mxu0
    %1510 = vst [vmem:[#allocation11] sm:$0xff] %v1492
    %1511 = vst [vmem:[#allocation11 + $0x8] sm:$0xff] %v1497
    %1512 = vst [vmem:[#allocation11 + $0x10] sm:$0xff] %v1502
    %1513 = vst [vmem:[#allocation11 + $0x18] sm:$0xff] %v1507
    // Predicated region
    $region46: #{tpu_custom_call.1} parent=1 // pred_check
      _
    $region47: #{tpu_custom_call.1} parent=1 // pred_check_branch
      %1515 = sbr.rel (0) target = $region49
    $region48: #{tpu_custom_call.1} parent=1 // pred_region
      %s1517 = ssub.s32 512, 512
      %1518 = vsyncadd [#allocation4], %s1517
      %s1519 = sshll.u32 [#allocation11], 4
      %s1520 = int_to_ptr.vmem [resolvable:$true] %s1519
      %1525 = dma.vmem_to_hbm [thread:$0]  %s1520, 512, %s6, [#allocation4], 128, 128, 8
    $region49: #{tpu_custom_call.1} parent=1 // pred_fallthru
      _
    // Predicated region
    $region50: #{tpu_custom_call.1} parent=1 // pred_check
      _
    $region51: #{tpu_custom_call.1} parent=1 // pred_check_branch
      %1527 = sbr.rel (0) target = $region53
    $region52: #{tpu_custom_call.1} parent=1 // pred_region
      %1528 = dma.done [#allocation4], 512
    $region53: #{tpu_custom_call.1} parent=1 // pred_fallthru
      _
    %1529 = vsyncpa [#allocation3], 1
    %1530 = vsyncpa [#allocation6], 1
    %1531 = vsyncpa [#allocation9], 1
    %1532 = vsyncpa [#allocation4], 1

</llo_original>
